<compile_context>
chip_gen: v6e
topology: v6e:2x2x1
jax: 0.10.0
libtpu: 0.0.40
codegen_flags: <defaults>
</compile_context>

<pallas_src>
import numpy as np
import jax
import jax.numpy as jnp
from jax.experimental import pallas as pl
from jax.experimental.pallas import tpu as pltpu

# ---------------- config (small shapes consistent with the module) ----------
SAMPLE_RATE = 16000
N_FFT       = 128          # window_size
HOP         = 32           # hop_size
MEL_BINS    = 32
FMIN, FMAX  = 50.0, 8000.0
CLASSES     = 8            # classes_num
AMIN        = 1e-10
BN_EPS      = 1e-5
INTERP      = 30           # self.interpolate_ratio

B = 2
L = 2048
T = L // HOP + 1           # frames_num (center=True, reflect pad) = 65
F = N_FFT // 2 + 1         # rFFT bins = 65
F_PAD = 72                 # F rounded up to a sublane multiple (8)

# synthetic encoder stem: /32 in time, /8 in mel (stand-in for efficientnet-b0)
TP, MP = 32, 8
T_SEG  = T // TP           # 2
M_SEG  = MEL_BINS // MP    # 4
T64    = T_SEG * TP        # 64 frames actually consumed by the encoder
G      = B * T_SEG         # 4 (batch, segment) lane groups
D_STEM = 128               # temporal-embed width of the factorized stem
FEAT   = 256               # encoder feature dim (1280 in tf_efficientnet_b0, scaled down)
HID    = 256               # fc1 output (1024 in the original, scaled down)
NOUT   = 2 + T_SEG         # packed output rows per item: [clipwise, logit, seg_0..seg_{T_SEG-1}]

# ---------------- packed parameter-slab layout ------------------------------
WLANE   = 256                           # lane width of both slabs
# bf16 slab rows
R_WDFT  = 0                             # (2*F_PAD, N_FFT)   windowed DFT (re | im)
R_WTIME = R_WDFT + 2 * F_PAD            # (TP, D_STEM)       temporal patch embed
R_POOLM = R_WTIME + TP                  # (M_SEG, MEL_BINS)  learned mel-patch pooling
R_WC    = R_POOLM + 8                   # (D_STEM, FEAT)     stem channel projection
R_WFC   = R_WC + D_STEM                 # (FEAT, HID)        fc1
R_WHEAD = R_WFC + FEAT                  # (HID, 2*CLASSES)   att | cla merged head
ROWS_B  = R_WHEAD + HID                 # 824 (multiple of 8)
# f32 slab layout
COL_BNS   = 128                         # bn0 scale * 10/ln(10), per-mel column
COL_BNB   = 129                         # bn0 bias, per-mel column
ROW_BC    = MEL_BINS                    # bc   (FEAT)
ROW_BFC   = MEL_BINS + 1                # bfc  (HID)
ROW_BHEAD = MEL_BINS + 2                # bhead (2*CLASSES)
ROWS_F    = 40                          # multiple of 8


# ---------------- fused kernel --------------------------------------------
def _fused_sed_kernel(fr_ref, bs_ref, fs_ref, out_ref):
    # ---- windowed DFT (real & imag merged into one MXU matmul) + power ----
    # frames: (N_FFT, B*T64) bf16, lanes ordered (b, t) b-major — fully lane-dense.
    wdft = bs_ref[R_WDFT:R_WDFT + 2 * F_PAD, 0:N_FFT]                 # (144, 128) bf16
    spec = jnp.dot(wdft, fr_ref[...],
                   preferred_element_type=jnp.float32)                # (2*F_PAD, 128)
    re = spec[0:F_PAD, :]
    im = spec[F_PAD:2 * F_PAD, :]
    power = re * re + im * im                                         # (F_PAD, 128) f32

    # ---- mel (f32 for log fidelity) + power_to_db + bn0 (scales folded) ----
    melT = fs_ref[0:MEL_BINS, 0:F_PAD]                                # (32, 72) f32
    mel = jnp.dot(melT, power, preferred_element_type=jnp.float32)    # (32, 128)
    bns = fs_ref[0:MEL_BINS, COL_BNS:COL_BNS + 1]                     # 10/ln10 * bn scale
    bnb = fs_ref[0:MEL_BINS, COL_BNB:COL_BNB + 1]
    lt = jnp.log(jnp.maximum(mel, AMIN)) * bns + bnb                  # mel on sublanes

    # ---- synthetic encoder stem (separable patchify conv + GELU) ----
    poolM = bs_ref[R_POOLM:R_POOLM + M_SEG, 0:MEL_BINS]               # (4, 32) bf16
    m1 = jnp.dot(poolM, lt.astype(jnp.bfloat16),
                 preferred_element_type=jnp.float32)                  # (M_SEG, 128)

    # fold the G=(b,seg) lane groups into sublanes -> rows (b, seg, m)
    a = jnp.concatenate([m1[:, g * TP:(g + 1) * TP] for g in range(G)],
                        axis=0)                                       # (G*M_SEG=16, TP=32)

    wtime = bs_ref[R_WTIME:R_WTIME + TP, 0:D_STEM]                    # (32, 128) bf16
    f1 = jnp.dot(a.astype(jnp.bfloat16), wtime,
                 preferred_element_type=jnp.float32)                  # (16, D_STEM)

    wc = bs_ref[R_WC:R_WC + D_STEM, 0:FEAT]
    bc = fs_ref[ROW_BC:ROW_BC + 1, 0:FEAT]
    y = jnp.dot(f1.astype(jnp.bfloat16), wc,
                preferred_element_type=jnp.float32) + bc              # (16, FEAT)
    y = jax.nn.gelu(y)

    # ---- torch.mean(x, dim=3): mean over the M_SEG mel positions per segment ----
    feat = jnp.concatenate(
        [jnp.sum(y[i * M_SEG:(i + 1) * M_SEG, :], axis=0, keepdims=True)
         for i in range(G)], axis=0) * (1.0 / M_SEG)                  # (G, FEAT), rows (b, seg)

    # ---- F.max_pool1d + F.avg_pool1d (k=3, s=1, p=1) along time, per batch item ----
    NEG = -1e30                                                       # finite pad (safer than -inf)
    zrow = jnp.zeros((1, FEAT), jnp.float32)
    nrow = jnp.full((1, FEAT), NEG, jnp.float32)
    pooled = []
    for b in range(B):
        blk = feat[b * T_SEG:(b + 1) * T_SEG, :]                      # (T_SEG, FEAT)
        head = blk[0:T_SEG - 1, :]
        tail = blk[1:T_SEG, :]
        prev_a = jnp.concatenate([zrow, head], axis=0)
        next_a = jnp.concatenate([tail, zrow], axis=0)
        prev_m = jnp.concatenate([nrow, head], axis=0)
        next_m = jnp.concatenate([tail, nrow], axis=0)
        x_max = jnp.maximum(jnp.maximum(prev_m, blk), next_m)
        x_avg = (prev_a + blk + next_a) * (1.0 / 3.0)                 # count_include_pad
        pooled.append(x_max + x_avg)
    x = jnp.concatenate(pooled, axis=0)                               # (G, FEAT)

    # ---- fc1 + ReLU (M = B*T_SEG rows) ----
    wfc = bs_ref[R_WFC:R_WFC + FEAT, 0:HID]
    bfc = fs_ref[ROW_BFC:ROW_BFC + 1, 0:HID]
    h = jnp.dot(x.astype(jnp.bfloat16), wfc,
                preferred_element_type=jnp.float32) + bfc
    h = jnp.maximum(h, 0.0)                                           # (G, HID)

    # ---- AttBlock: att & cla 1x1 convs merged into one matmul ----
    whead = bs_ref[R_WHEAD:R_WHEAD + HID, 0:2 * CLASSES]
    bhead = fs_ref[ROW_BHEAD:ROW_BHEAD + 1, 0:2 * CLASSES]
    hz = jnp.dot(h.astype(jnp.bfloat16), whead,
                 preferred_element_type=jnp.float32) + bhead          # (G, 2*C)
    att = jnp.clip(hz[:, 0:CLASSES], -10.0, 10.0)
    cla_logit = hz[:, CLASSES:2 * CLASSES]

    rows = []
    for b in range(B):
        a_b = att[b * T_SEG:(b + 1) * T_SEG, :]                       # (T_SEG, C)
        l_b = cla_logit[b * T_SEG:(b + 1) * T_SEG, :]
        a_b = a_b - jnp.max(a_b, axis=0, keepdims=True)               # softmax over time
        ea = jnp.exp(a_b)
        norm_att = ea / jnp.sum(ea, axis=0, keepdims=True)            # exact reciprocal
        cla = jax.nn.sigmoid(l_b)                                     # segmentwise output
        clipw = jnp.sum(norm_att * cla, axis=0, keepdims=True)        # (1, C)
        logit = jnp.sum(norm_att * l_b, axis=0, keepdims=True)        # (1, C)
        rows.append(jnp.concatenate([clipw, logit, cla], axis=0))     # (NOUT, C)
    packed = jnp.concatenate(rows, axis=0)                            # (B*NOUT, C)

    # single full-vreg, unmasked store (lane-padded to 128)
    out_ref[...] = jnp.concatenate(
        [packed, jnp.zeros((B * NOUT, 128 - CLASSES), jnp.float32)], axis=1)


def fused_sed(framesL, bslab, fslab):
    return pl.pallas_call(
        _fused_sed_kernel,
        out_shape=jax.ShapeDtypeStruct((B * NOUT, 128), jnp.float32),
        grid_spec=pltpu.PrefetchScalarGridSpec(
            num_scalar_prefetch=0,
            grid=(1,),                                                # single step, B folded on lanes
            in_specs=[
                pl.BlockSpec((N_FFT, B * T64), lambda i: (0, 0)),     # framed audio (bf16)
                pl.BlockSpec((ROWS_B, WLANE), lambda i: (0, 0)),      # bf16 weight slab
                pl.BlockSpec((ROWS_F, WLANE), lambda i: (0, 0)),      # f32 slab (melT/bn/biases)
            ],
            out_specs=pl.BlockSpec((B * NOUT, 128), lambda i: (0, 0)),
        ),
        compiler_params=pltpu.CompilerParams(dimension_semantics=("arbitrary",)),
    )(framesL, bslab, fslab)


# ---------------- parameter construction (deterministic, synthetic) ----------
def _mel_filterbank():
    def hz_to_mel(f): return 2595.0 * np.log10(1.0 + f / 700.0)
    def mel_to_hz(m): return 700.0 * (10.0 ** (m / 2595.0) - 1.0)
    fft_freqs = np.linspace(0.0, SAMPLE_RATE / 2.0, F)
    mel_pts = np.linspace(hz_to_mel(FMIN), hz_to_mel(FMAX), MEL_BINS + 2)
    hz_pts = mel_to_hz(mel_pts)
    fb = np.zeros((F, MEL_BINS), dtype=np.float32)
    for m in range(MEL_BINS):
        f_l, f_c, f_r = hz_pts[m], hz_pts[m + 1], hz_pts[m + 2]
        lower = (fft_freqs - f_l) / max(f_c - f_l, 1e-6)
        upper = (f_r - fft_freqs) / max(f_r - f_c, 1e-6)
        fb[:, m] = np.maximum(0.0, np.minimum(lower, upper))
    return fb


def make_params():
    ks = jax.random.split(jax.random.PRNGKey(0), 6)

    # windowed DFT, real & imag stacked (rows of each half padded to F_PAD)
    n = np.arange(N_FFT)
    window = (0.5 - 0.5 * np.cos(2.0 * np.pi * n / N_FFT)).astype(np.float32)  # periodic Hann
    k = np.arange(F)
    ang = 2.0 * np.pi * np.outer(n, k) / N_FFT
    wdft = np.zeros((2 * F_PAD, N_FFT), np.float32)
    wdft[0:F, :] = (np.cos(ang).astype(np.float32) * window[:, None]).T
    wdft[F_PAD:F_PAD + F, :] = ((-np.sin(ang)).astype(np.float32) * window[:, None]).T

    melT = _mel_filterbank().T                                          # (MEL, F)

    # bn0 (init_bn + fresh running stats, eval): gamma=1, beta=0, mean=0, var=1.
    # The 10*log10 scale is folded into the bn scale (kernel uses natural log).
    gamma = np.ones(MEL_BINS, np.float32); beta = np.zeros(MEL_BINS, np.float32)
    rmean = np.zeros(MEL_BINS, np.float32); rvar = np.ones(MEL_BINS, np.float32)
    s = gamma / np.sqrt(rvar + BN_EPS)
    bnscale = s * np.float32(10.0 / np.log(10.0))
    bnbias = beta - rmean * s

    def xavier(key, shape):
        bound = float(np.sqrt(6.0 / (shape[0] + shape[1])))
        return np.asarray(jax.random.uniform(key, shape, jnp.float32, -bound, bound))

    # synthetic separable patchify stem; the 3-channel expand is folded into these weights.
    wmel = np.asarray(jax.random.normal(ks[0], (MP,), jnp.float32)) / np.sqrt(MP)
    poolM = np.zeros((M_SEG, MEL_BINS), np.float32)                     # learned mel-patch pooling
    for m in range(M_SEG):
        poolM[m, m * MP:(m + 1) * MP] = wmel
    wtime = 0.05 * np.asarray(jax.random.normal(ks[1], (TP, D_STEM), jnp.float32))
    wc = xavier(ks[2], (D_STEM, FEAT))
    wfc = xavier(ks[3], (FEAT, HID))                                    # init_layer: xavier, bias=0
    whead = np.concatenate([xavier(ks[4], (HID, CLASSES)),
                            xavier(ks[5], (HID, CLASSES))], axis=1)     # att | cla

    # ---- pack into the two slabs ----
    bslab = np.zeros((ROWS_B, WLANE), np.float32)
    bslab[R_WDFT:R_WDFT + 2 * F_PAD, 0:N_FFT] = wdft
    bslab[R_WTIME:R_WTIME + TP, 0:D_STEM] = wtime
    bslab[R_POOLM:R_POOLM + M_SEG, 0:MEL_BINS] = poolM
    bslab[R_WC:R_WC + D_STEM, 0:FEAT] = wc
    bslab[R_WFC:R_WFC + FEAT, 0:HID] = wfc
    bslab[R_WHEAD:R_WHEAD + HID, 0:2 * CLASSES] = whead

    fslab = np.zeros((ROWS_F, WLANE), np.float32)
    fslab[0:MEL_BINS, 0:F] = melT
    fslab[0:MEL_BINS, COL_BNS] = bnscale
    fslab[0:MEL_BINS, COL_BNB] = bnbias
    # bc / bfc / bhead rows stay zero (init_layer sets biases to 0)

    return {"bslab": jnp.asarray(bslab, jnp.bfloat16),
            "fslab": jnp.asarray(fslab, jnp.float32)}


# ---------------- full forward (hot path in one Pallas kernel) ---------------
def audio_sed_forward(audio, params):
    # STFT framing (center=True, reflect pad n_fft//2) done in XLA: ~32 KB/item and it
    # presents a lane-aligned (N_FFT, B*T64) MXU operand to the kernel (per perf review).
    pad = N_FFT // 2
    padded = jnp.pad(audio, ((0, 0), (pad, pad)), mode="reflect")        # (B, L + N_FFT)
    idx = jnp.arange(T64)[:, None] * HOP + jnp.arange(N_FFT)[None, :]    # (T64, N_FFT)
    frames = padded[:, idx]                                              # (B, T64, N_FFT)
    framesL = jnp.transpose(frames, (2, 0, 1)).reshape(N_FFT, B * T64)   # (b,t) on lanes, b-major
    framesL = framesL.astype(jnp.bfloat16)

    out = fused_sed(framesL, params["bslab"], params["fslab"])           # (B*NOUT, 128)
    packed = out[:, 0:CLASSES].reshape(B, NOUT, CLASSES)
    clipwise = packed[:, 0, :]
    logit = packed[:, 1, :]
    seg = packed[:, 2:, :]                                               # (B, T_SEG, C)

    # interpolate(ratio=30) + pad_framewise_output(frames_num) — data movement only
    up = jnp.repeat(seg, INTERP, axis=1)                                 # (B, T_SEG*30, C)
    tail = jnp.repeat(up[:, -1:, :], T - up.shape[1], axis=1)
    framewise = jnp.concatenate([up, tail], axis=1)                      # (B, T, C)

    return {"framewise_output": framewise,
            "logit": logit,
            "clipwise_output": clipwise}


if __name__ == "__main__":
    params = make_params()
    audio = jax.random.normal(jax.random.PRNGKey(0), (B, L), jnp.float32)
    fwd = jax.jit(audio_sed_forward)
    out = jax.block_until_ready(fwd(audio, params))
    assert out["framewise_output"].shape == (B, T, CLASSES)
    assert out["clipwise_output"].shape == (B, CLASSES)
    assert out["logit"].shape == (B, CLASSES)
    finite = (jnp.all(jnp.isfinite(out["framewise_output"]))
              & jnp.all(jnp.isfinite(out["clipwise_output"]))
              & jnp.all(jnp.isfinite(out["logit"])))
    assert bool(finite)
    print("KERNEL_OK")
</pallas_src>

<mosaic_0001>
module attributes {stable_mosaic.version = 11 : i64} {
  func.func @_fused_sed_kernel(%arg0: i32, %arg1: memref<128x128xbf16, #tpu.memory_space<vmem>>, %arg2: memref<824x256xbf16, #tpu.memory_space<vmem>>, %arg3: memref<40x256xf32, #tpu.memory_space<vmem>>, %arg4: memref<8x128xf32, #tpu.memory_space<vmem>>) attributes {dimension_semantics = [#tpu.dimension_semantics<arbitrary>], iteration_bounds = array<i64: 1>, scalar_prefetch = 0 : i64, scratch_operands = 0 : i64, tpu.core_type = #tpu.core_type<tc>, window_params = [{pipeline_mode = #tpu.pipeline_mode<synchronous>, transform_indices = @transform_0, window_bounds = array<i64: 128, 128>}, {pipeline_mode = #tpu.pipeline_mode<synchronous>, transform_indices = @transform_1, window_bounds = array<i64: 824, 256>}, {pipeline_mode = #tpu.pipeline_mode<synchronous>, transform_indices = @transform_2, window_bounds = array<i64: 40, 256>}, {pipeline_mode = #tpu.pipeline_mode<synchronous>, transform_indices = @transform_3, window_bounds = array<i64: 8, 128>}]} {
    %c0 = arith.constant 0 : index
    %c0_0 = arith.constant 0 : index
    %0 = vector.load %arg2[%c0, %c0_0] : memref<824x256xbf16, #tpu.memory_space<vmem>>, vector<144x128xbf16>
    %c0_1 = arith.constant 0 : index
    %c0_2 = arith.constant 0 : index
    %1 = vector.load %arg1[%c0_1, %c0_2] : memref<128x128xbf16, #tpu.memory_space<vmem>>, vector<128x128xbf16>
    %cst = arith.constant dense<0.000000e+00> : vector<144x128xf32>
    %2 = tpu.matmul %0, %1, %cst {dimension_numbers = #tpu.dot_dimension_numbers<[1], [0], [0], [1], [0, 0, 1, 1], [], []>} : vector<144x128xbf16>, vector<128x128xbf16>, vector<144x128xf32> -> vector<144x128xf32>
    %3 = vector.extract_strided_slice %2 {offsets = [0, 0], sizes = [72, 128], strides = [1, 1]} : vector<144x128xf32> to vector<72x128xf32>
    %4 = vector.extract_strided_slice %2 {offsets = [72, 0], sizes = [72, 128], strides = [1, 1]} : vector<144x128xf32> to vector<72x128xf32>
    %5 = arith.mulf %3, %3 : vector<72x128xf32>
    %6 = arith.mulf %4, %4 : vector<72x128xf32>
    %7 = arith.addf %5, %6 : vector<72x128xf32>
    %c0_3 = arith.constant 0 : index
    %c0_4 = arith.constant 0 : index
    %8 = vector.load %arg3[%c0_3, %c0_4] : memref<40x256xf32, #tpu.memory_space<vmem>>, vector<32x72xf32>
    %cst_5 = arith.constant dense<0.000000e+00> : vector<32x128xf32>
    %9 = tpu.matmul %8, %7, %cst_5 {dimension_numbers = #tpu.dot_dimension_numbers<[1], [0], [0], [1], [0, 0, 1, 1], [], []>} : vector<32x72xf32>, vector<72x128xf32>, vector<32x128xf32> -> vector<32x128xf32>
    %c0_6 = arith.constant 0 : index
    %c128 = arith.constant 128 : index
    %10 = vector.load %arg3[%c0_6, %c128] : memref<40x256xf32, #tpu.memory_space<vmem>>, vector<32x1xf32>
    %c0_7 = arith.constant 0 : index
    %c129 = arith.constant 129 : index
    %11 = vector.load %arg3[%c0_7, %c129] : memref<40x256xf32, #tpu.memory_space<vmem>>, vector<32x1xf32>
    %cst_8 = arith.constant 1.000000e-10 : f32
    %12 = vector.broadcast %cst_8 : f32 to vector<32x128xf32>
    %13 = arith.maximumf %9, %12 : vector<32x128xf32>
    %14 = math.log %13 : vector<32x128xf32>
    %15 = vector.broadcast %10 : vector<32x1xf32> to vector<32x128xf32>
    %16 = arith.mulf %14, %15 : vector<32x128xf32>
    %17 = vector.broadcast %11 : vector<32x1xf32> to vector<32x128xf32>
    %18 = arith.addf %16, %17 : vector<32x128xf32>
    %c176 = arith.constant 176 : index
    %c0_9 = arith.constant 0 : index
    %19 = vector.load %arg2[%c176, %c0_9] : memref<824x256xbf16, #tpu.memory_space<vmem>>, vector<4x32xbf16>
    %20 = arith.truncf %18 : vector<32x128xf32> to vector<32x128xbf16>
    %cst_10 = arith.constant dense<0.000000e+00> : vector<4x128xf32>
    %21 = tpu.matmul %19, %20, %cst_10 {dimension_numbers = #tpu.dot_dimension_numbers<[1], [0], [0], [1], [0, 0, 1, 1], [], []>} : vector<4x32xbf16>, vector<32x128xbf16>, vector<4x128xf32> -> vector<4x128xf32>
    %22 = vector.extract_strided_slice %21 {offsets = [0, 0], sizes = [4, 32], strides = [1, 1]} : vector<4x128xf32> to vector<4x32xf32>
    %23 = vector.extract_strided_slice %21 {offsets = [0, 32], sizes = [4, 32], strides = [1, 1]} : vector<4x128xf32> to vector<4x32xf32>
    %24 = vector.extract_strided_slice %21 {offsets = [0, 64], sizes = [4, 32], strides = [1, 1]} : vector<4x128xf32> to vector<4x32xf32>
    %25 = vector.extract_strided_slice %21 {offsets = [0, 96], sizes = [4, 32], strides = [1, 1]} : vector<4x128xf32> to vector<4x32xf32>
    %26 = tpu.concatenate %22, %23, %24, %25 in 0 : vector<4x32xf32>, vector<4x32xf32>, vector<4x32xf32>, vector<4x32xf32> -> vector<16x32xf32>
    %c144 = arith.constant 144 : index
    %c0_11 = arith.constant 0 : index
    %27 = vector.load %arg2[%c144, %c0_11] : memref<824x256xbf16, #tpu.memory_space<vmem>>, vector<32x128xbf16>
    %28 = arith.truncf %26 : vector<16x32xf32> to vector<16x32xbf16>
    %cst_12 = arith.constant dense<0.000000e+00> : vector<16x128xf32>
    %29 = tpu.matmul %28, %27, %cst_12 {dimension_numbers = #tpu.dot_dimension_numbers<[1], [0], [0], [1], [0, 0, 1, 1], [], []>} : vector<16x32xbf16>, vector<32x128xbf16>, vector<16x128xf32> -> vector<16x128xf32>
    %c184 = arith.constant 184 : index
    %c0_13 = arith.constant 0 : index
    %30 = vector.load %arg2[%c184, %c0_13] : memref<824x256xbf16, #tpu.memory_space<vmem>>, vector<128x256xbf16>
    %c32 = arith.constant 32 : index
    %c0_14 = arith.constant 0 : index
    %31 = vector.load %arg3[%c32, %c0_14] : memref<40x256xf32, #tpu.memory_space<vmem>>, vector<1x256xf32>
    %32 = arith.truncf %29 : vector<16x128xf32> to vector<16x128xbf16>
    %cst_15 = arith.constant dense<0.000000e+00> : vector<16x256xf32>
    %33 = tpu.matmul %32, %30, %cst_15 {dimension_numbers = #tpu.dot_dimension_numbers<[1], [0], [0], [1], [0, 0, 1, 1], [], []>} : vector<16x128xbf16>, vector<128x256xbf16>, vector<16x256xf32> -> vector<16x256xf32>
    %34 = vector.broadcast %31 : vector<1x256xf32> to vector<16x256xf32>
    %35 = arith.addf %33, %34 : vector<16x256xf32>
    %36 = arith.mulf %35, %35 : vector<16x256xf32>
    %37 = arith.mulf %35, %36 : vector<16x256xf32>
    %cst_16 = arith.constant 4.471500e-02 : f32
    %38 = vector.broadcast %cst_16 : f32 to vector<16x256xf32>
    %39 = arith.mulf %38, %37 : vector<16x256xf32>
    %40 = arith.addf %35, %39 : vector<16x256xf32>
    %cst_17 = arith.constant 0.797884583 : f32
    %41 = vector.broadcast %cst_17 : f32 to vector<16x256xf32>
    %42 = arith.mulf %41, %40 : vector<16x256xf32>
    %43 = math.tanh %42 : vector<16x256xf32>
    %cst_18 = arith.constant 1.000000e+00 : f32
    %44 = vector.broadcast %cst_18 : f32 to vector<16x256xf32>
    %45 = arith.addf %44, %43 : vector<16x256xf32>
    %cst_19 = arith.constant 5.000000e-01 : f32
    %46 = vector.broadcast %cst_19 : f32 to vector<16x256xf32>
    %47 = arith.mulf %46, %45 : vector<16x256xf32>
    %48 = arith.mulf %35, %47 : vector<16x256xf32>
    %49 = vector.extract_strided_slice %48 {offsets = [0, 0], sizes = [4, 256], strides = [1, 1]} : vector<16x256xf32> to vector<4x256xf32>
    %cst_20 = arith.constant dense<0.000000e+00> : vector<256xf32>
    %50 = vector.multi_reduction <add>, %49, %cst_20 [0] : vector<4x256xf32> to vector<256xf32>
    %51 = vector.shape_cast %50 : vector<256xf32> to vector<1x256xf32>
    %52 = vector.extract_strided_slice %48 {offsets = [4, 0], sizes = [4, 256], strides = [1, 1]} : vector<16x256xf32> to vector<4x256xf32>
    %cst_21 = arith.constant dense<0.000000e+00> : vector<256xf32>
    %53 = vector.multi_reduction <add>, %52, %cst_21 [0] : vector<4x256xf32> to vector<256xf32>
    %54 = vector.shape_cast %53 : vector<256xf32> to vector<1x256xf32>
    %55 = vector.extract_strided_slice %48 {offsets = [8, 0], sizes = [4, 256], strides = [1, 1]} : vector<16x256xf32> to vector<4x256xf32>
    %cst_22 = arith.constant dense<0.000000e+00> : vector<256xf32>
    %56 = vector.multi_reduction <add>, %55, %cst_22 [0] : vector<4x256xf32> to vector<256xf32>
    %57 = vector.shape_cast %56 : vector<256xf32> to vector<1x256xf32>
    %58 = vector.extract_strided_slice %48 {offsets = [12, 0], sizes = [4, 256], strides = [1, 1]} : vector<16x256xf32> to vector<4x256xf32>
    %cst_23 = arith.constant dense<0.000000e+00> : vector<256xf32>
    %59 = vector.multi_reduction <add>, %58, %cst_23 [0] : vector<4x256xf32> to vector<256xf32>
    %60 = vector.shape_cast %59 : vector<256xf32> to vector<1x256xf32>
    %61 = tpu.concatenate %51, %54, %57, %60 in 0 : vector<1x256xf32>, vector<1x256xf32>, vector<1x256xf32>, vector<1x256xf32> -> vector<4x256xf32>
    %cst_24 = arith.constant 2.500000e-01 : f32
    %62 = vector.broadcast %cst_24 : f32 to vector<4x256xf32>
    %63 = arith.mulf %61, %62 : vector<4x256xf32>
    %cst_25 = arith.constant 0.000000e+00 : f32
    %64 = vector.broadcast %cst_25 : f32 to vector<1x256xf32>
    %cst_26 = arith.constant -1.000000e+30 : f32
    %65 = vector.broadcast %cst_26 : f32 to vector<1x256xf32>
    %66 = vector.extract_strided_slice %63 {offsets = [0, 0], sizes = [2, 256], strides = [1, 1]} : vector<4x256xf32> to vector<2x256xf32>
    %67 = vector.extract_strided_slice %66 {offsets = [0, 0], sizes = [1, 256], strides = [1, 1]} : vector<2x256xf32> to vector<1x256xf32>
    %68 = vector.extract_strided_slice %66 {offsets = [1, 0], sizes = [1, 256], strides = [1, 1]} : vector<2x256xf32> to vector<1x256xf32>
    %69 = tpu.concatenate %64, %67 in 0 : vector<1x256xf32>, vector<1x256xf32> -> vector<2x256xf32>
    %70 = tpu.concatenate %68, %64 in 0 : vector<1x256xf32>, vector<1x256xf32> -> vector<2x256xf32>
    %71 = tpu.concatenate %65, %67 in 0 : vector<1x256xf32>, vector<1x256xf32> -> vector<2x256xf32>
    %72 = tpu.concatenate %68, %65 in 0 : vector<1x256xf32>, vector<1x256xf32> -> vector<2x256xf32>
    %73 = arith.maximumf %71, %66 : vector<2x256xf32>
    %74 = arith.maximumf %73, %72 : vector<2x256xf32>
    %75 = arith.addf %69, %66 : vector<2x256xf32>
    %76 = arith.addf %75, %70 : vector<2x256xf32>
    %cst_27 = arith.constant 0.333333343 : f32
    %77 = vector.broadcast %cst_27 : f32 to vector<2x256xf32>
    %78 = arith.mulf %76, %77 : vector<2x256xf32>
    %79 = arith.addf %74, %78 : vector<2x256xf32>
    %80 = vector.extract_strided_slice %63 {offsets = [2, 0], sizes = [2, 256], strides = [1, 1]} : vector<4x256xf32> to vector<2x256xf32>
    %81 = vector.extract_strided_slice %80 {offsets = [0, 0], sizes = [1, 256], strides = [1, 1]} : vector<2x256xf32> to vector<1x256xf32>
    %82 = vector.extract_strided_slice %80 {offsets = [1, 0], sizes = [1, 256], strides = [1, 1]} : vector<2x256xf32> to vector<1x256xf32>
    %83 = tpu.concatenate %64, %81 in 0 : vector<1x256xf32>, vector<1x256xf32> -> vector<2x256xf32>
    %84 = tpu.concatenate %82, %64 in 0 : vector<1x256xf32>, vector<1x256xf32> -> vector<2x256xf32>
    %85 = tpu.concatenate %65, %81 in 0 : vector<1x256xf32>, vector<1x256xf32> -> vector<2x256xf32>
    %86 = tpu.concatenate %82, %65 in 0 : vector<1x256xf32>, vector<1x256xf32> -> vector<2x256xf32>
    %87 = arith.maximumf %85, %80 : vector<2x256xf32>
    %88 = arith.maximumf %87, %86 : vector<2x256xf32>
    %89 = arith.addf %83, %80 : vector<2x256xf32>
    %90 = arith.addf %89, %84 : vector<2x256xf32>
    %cst_28 = arith.constant 0.333333343 : f32
    %91 = vector.broadcast %cst_28 : f32 to vector<2x256xf32>
    %92 = arith.mulf %90, %91 : vector<2x256xf32>
    %93 = arith.addf %88, %92 : vector<2x256xf32>
    %94 = tpu.concatenate %79, %93 in 0 : vector<2x256xf32>, vector<2x256xf32> -> vector<4x256xf32>
    %c312 = arith.constant 312 : index
    %c0_29 = arith.constant 0 : index
    %95 = vector.load %arg2[%c312, %c0_29] : memref<824x256xbf16, #tpu.memory_space<vmem>>, vector<256x256xbf16>
    %c33 = arith.constant 33 : index
    %c0_30 = arith.constant 0 : index
    %96 = vector.load %arg3[%c33, %c0_30] : memref<40x256xf32, #tpu.memory_space<vmem>>, vector<1x256xf32>
    %97 = arith.truncf %94 : vector<4x256xf32> to vector<4x256xbf16>
    %cst_31 = arith.constant dense<0.000000e+00> : vector<4x256xf32>
    %98 = tpu.matmul %97, %95, %cst_31 {dimension_numbers = #tpu.dot_dimension_numbers<[1], [0], [0], [1], [0, 0, 1, 1], [], []>} : vector<4x256xbf16>, vector<256x256xbf16>, vector<4x256xf32> -> vector<4x256xf32>
    %99 = vector.broadcast %96 : vector<1x256xf32> to vector<4x256xf32>
    %100 = arith.addf %98, %99 : vector<4x256xf32>
    %cst_32 = arith.constant 0.000000e+00 : f32
    %101 = vector.broadcast %cst_32 : f32 to vector<4x256xf32>
    %102 = arith.maximumf %100, %101 : vector<4x256xf32>
    %c568 = arith.constant 568 : index
    %c0_33 = arith.constant 0 : index
    %103 = vector.load %arg2[%c568, %c0_33] : memref<824x256xbf16, #tpu.memory_space<vmem>>, vector<256x16xbf16>
    %c34 = arith.constant 34 : index
    %c0_34 = arith.constant 0 : index
    %104 = vector.load %arg3[%c34, %c0_34] : memref<40x256xf32, #tpu.memory_space<vmem>>, vector<1x16xf32>
    %105 = arith.truncf %102 : vector<4x256xf32> to vector<4x256xbf16>
    %cst_35 = arith.constant dense<0.000000e+00> : vector<4x16xf32>
    %106 = tpu.matmul %105, %103, %cst_35 {dimension_numbers = #tpu.dot_dimension_numbers<[1], [0], [0], [1], [0, 0, 1, 1], [], []>} : vector<4x256xbf16>, vector<256x16xbf16>, vector<4x16xf32> -> vector<4x16xf32>
    %107 = vector.broadcast %104 : vector<1x16xf32> to vector<4x16xf32>
    %108 = arith.addf %106, %107 : vector<4x16xf32>
    %109 = vector.extract_strided_slice %108 {offsets = [0, 0], sizes = [4, 8], strides = [1, 1]} : vector<4x16xf32> to vector<4x8xf32>
    %cst_36 = arith.constant -1.000000e+01 : f32
    %cst_37 = arith.constant 1.000000e+01 : f32
    %110 = vector.broadcast %cst_36 : f32 to vector<4x8xf32>
    %111 = arith.maximumf %110, %109 : vector<4x8xf32>
    %112 = vector.broadcast %cst_37 : f32 to vector<4x8xf32>
    %113 = arith.minimumf %112, %111 : vector<4x8xf32>
    %114 = vector.extract_strided_slice %108 {offsets = [0, 8], sizes = [4, 8], strides = [1, 1]} : vector<4x16xf32> to vector<4x8xf32>
    %115 = vector.extract_strided_slice %113 {offsets = [0, 0], sizes = [2, 8], strides = [1, 1]} : vector<4x8xf32> to vector<2x8xf32>
    %116 = vector.extract_strided_slice %114 {offsets = [0, 0], sizes = [2, 8], strides = [1, 1]} : vector<4x8xf32> to vector<2x8xf32>
    %cst_38 = arith.constant dense<0xFF800000> : vector<8xf32>
    %117 = vector.multi_reduction <maximumf>, %115, %cst_38 [0] : vector<2x8xf32> to vector<8xf32>
    %118 = vector.shape_cast %117 : vector<8xf32> to vector<1x8xf32>
    %119 = vector.broadcast %118 : vector<1x8xf32> to vector<2x8xf32>
    %120 = arith.subf %115, %119 : vector<2x8xf32>
    %121 = math.exp %120 : vector<2x8xf32>
    %cst_39 = arith.constant dense<0.000000e+00> : vector<8xf32>
    %122 = vector.multi_reduction <add>, %121, %cst_39 [0] : vector<2x8xf32> to vector<8xf32>
    %123 = vector.shape_cast %122 : vector<8xf32> to vector<1x8xf32>
    %124 = vector.broadcast %123 : vector<1x8xf32> to vector<2x8xf32>
    %125 = arith.divf %121, %124 : vector<2x8xf32>
    %126 = arith.negf %116 : vector<2x8xf32>
    %127 = math.exp %126 : vector<2x8xf32>
    %cst_40 = arith.constant 1.000000e+00 : f32
    %128 = vector.broadcast %cst_40 : f32 to vector<2x8xf32>
    %129 = arith.addf %128, %127 : vector<2x8xf32>
    %130 = arith.divf %128, %129 : vector<2x8xf32>
    %131 = arith.mulf %125, %130 : vector<2x8xf32>
    %cst_41 = arith.constant dense<0.000000e+00> : vector<8xf32>
    %132 = vector.multi_reduction <add>, %131, %cst_41 [0] : vector<2x8xf32> to vector<8xf32>
    %133 = vector.shape_cast %132 : vector<8xf32> to vector<1x8xf32>
    %134 = arith.mulf %125, %116 : vector<2x8xf32>
    %cst_42 = arith.constant dense<0.000000e+00> : vector<8xf32>
    %135 = vector.multi_reduction <add>, %134, %cst_42 [0] : vector<2x8xf32> to vector<8xf32>
    %136 = vector.shape_cast %135 : vector<8xf32> to vector<1x8xf32>
    %137 = tpu.concatenate %133, %136, %130 in 0 : vector<1x8xf32>, vector<1x8xf32>, vector<2x8xf32> -> vector<4x8xf32>
    %138 = vector.extract_strided_slice %113 {offsets = [2, 0], sizes = [2, 8], strides = [1, 1]} : vector<4x8xf32> to vector<2x8xf32>
    %139 = vector.extract_strided_slice %114 {offsets = [2, 0], sizes = [2, 8], strides = [1, 1]} : vector<4x8xf32> to vector<2x8xf32>
    %cst_43 = arith.constant dense<0xFF800000> : vector<8xf32>
    %140 = vector.multi_reduction <maximumf>, %138, %cst_43 [0] : vector<2x8xf32> to vector<8xf32>
    %141 = vector.shape_cast %140 : vector<8xf32> to vector<1x8xf32>
    %142 = vector.broadcast %141 : vector<1x8xf32> to vector<2x8xf32>
    %143 = arith.subf %138, %142 : vector<2x8xf32>
    %144 = math.exp %143 : vector<2x8xf32>
    %cst_44 = arith.constant dense<0.000000e+00> : vector<8xf32>
    %145 = vector.multi_reduction <add>, %144, %cst_44 [0] : vector<2x8xf32> to vector<8xf32>
    %146 = vector.shape_cast %145 : vector<8xf32> to vector<1x8xf32>
    %147 = vector.broadcast %146 : vector<1x8xf32> to vector<2x8xf32>
    %148 = arith.divf %144, %147 : vector<2x8xf32>
    %149 = arith.negf %139 : vector<2x8xf32>
    %150 = math.exp %149 : vector<2x8xf32>
    %cst_45 = arith.constant 1.000000e+00 : f32
    %151 = vector.broadcast %cst_45 : f32 to vector<2x8xf32>
    %152 = arith.addf %151, %150 : vector<2x8xf32>
    %153 = arith.divf %151, %152 : vector<2x8xf32>
    %154 = arith.mulf %148, %153 : vector<2x8xf32>
    %cst_46 = arith.constant dense<0.000000e+00> : vector<8xf32>
    %155 = vector.multi_reduction <add>, %154, %cst_46 [0] : vector<2x8xf32> to vector<8xf32>
    %156 = vector.shape_cast %155 : vector<8xf32> to vector<1x8xf32>
    %157 = arith.mulf %148, %139 : vector<2x8xf32>
    %cst_47 = arith.constant dense<0.000000e+00> : vector<8xf32>
    %158 = vector.multi_reduction <add>, %157, %cst_47 [0] : vector<2x8xf32> to vector<8xf32>
    %159 = vector.shape_cast %158 : vector<8xf32> to vector<1x8xf32>
    %160 = tpu.concatenate %156, %159, %153 in 0 : vector<1x8xf32>, vector<1x8xf32>, vector<2x8xf32> -> vector<4x8xf32>
    %161 = tpu.concatenate %137, %160 in 0 : vector<4x8xf32>, vector<4x8xf32> -> vector<8x8xf32>
    %cst_48 = arith.constant 0.000000e+00 : f32
    %162 = vector.broadcast %cst_48 : f32 to vector<8x120xf32>
    %163 = tpu.concatenate %161, %162 in 1 : vector<8x8xf32>, vector<8x120xf32> -> vector<8x128xf32>
    %c0_49 = arith.constant 0 : index
    %c0_50 = arith.constant 0 : index
    %164 = vector.load %arg4[%c0_49, %c0_50] : memref<8x128xf32, #tpu.memory_space<vmem>>, vector<8x128xf32>
    tpu.vector_store %arg4[%c0_49, %c0_50], %163 {strides = array<i32>} : memref<8x128xf32, #tpu.memory_space<vmem>>, vector<8x128xf32>,
    return
  }
  func.func @transform_0(%arg0: i32) -> (i32, i32) {
    %c0_i32 = arith.constant 0 : i32
    %c0_i32_0 = arith.constant 0 : i32
    %c0_i32_1 = arith.constant 0 : i32
    return %c0_i32, %c0_i32_0 : i32, i32
  }
  func.func @transform_1(%arg0: i32) -> (i32, i32) {
    %c0_i32 = arith.constant 0 : i32
    %c0_i32_0 = arith.constant 0 : i32
    %c0_i32_1 = arith.constant 0 : i32
    return %c0_i32, %c0_i32_0 : i32, i32
  }
  func.func @transform_2(%arg0: i32) -> (i32, i32) {
    %c0_i32 = arith.constant 0 : i32
    %c0_i32_0 = arith.constant 0 : i32
    %c0_i32_1 = arith.constant 0 : i32
    return %c0_i32, %c0_i32_0 : i32, i32
  }
  func.func @transform_3(%arg0: i32) -> (i32, i32) {
    %c0_i32 = arith.constant 0 : i32
    %c0_i32_0 = arith.constant 0 : i32
    %c0_i32_1 = arith.constant 0 : i32
    return %c0_i32, %c0_i32_0 : i32, i32
  }
}

</mosaic_0001>

<llo_original>
// kernel: audio_sed_forward.1
$region0: #{audio_sed_forward.1}
  #allocation0 [shape = 'u32[]', space=smem, size = 0x4, offset = 0x4, fixed_abs, tag = 'smem constant byte address 0x4 - core index']
  #allocation1 [shape = 'u32[144,128]{1,0:T(1,128)}', space=vmem, size = 0x12000, scoped, tag = 'internal scratch']
  %s0 = inlined_call_operand.vmem [shape: bf16[128,128], index: 0, kind: input, shape index: {}]
  %s1 = inlined_call_operand.vmem [shape: bf16[824,256], index: 1, kind: input, shape index: {}]
  %s2 = inlined_call_operand.vmem [shape: f32[40,256], index: 2, kind: input, shape index: {}]
  %s3 = inlined_call_operand.vmem [shape: f32[8,128], index: 3, kind: output, shape index: {}]
  %s4 = sld [smem:[#allocation0]]
  $region22: #{audio_sed_forward.1} parent=0
    _
  %s6 = ssub.s32 1, %s4
  %s7 = scalar_select 0, %s6, %s4
  // Predicated region
  $region2: #{audio_sed_forward.1} parent=0 // pred_check
    _
  $region3: #{audio_sed_forward.1} parent=0 // pred_check_branch
    %9 = sbr.rel (0) target = $region5
  $region4: #{audio_sed_forward.1} parent=0 // pred_region
    _
  $region5: #{audio_sed_forward.1} parent=0 // pred_fallthru
    _
  // Predicated region
  $region6: #{audio_sed_forward.1} parent=0 // pred_check
    _
  $region7: #{audio_sed_forward.1} parent=0 // pred_check_branch
    %11 = sbr.rel (0) target = $region9
  $region8: #{audio_sed_forward.1} parent=0 // pred_region
    _
  $region9: #{audio_sed_forward.1} parent=0 // pred_fallthru
    _
  // Predicated region
  $region10: #{audio_sed_forward.1} parent=0 // pred_check
    _
  $region11: #{audio_sed_forward.1} parent=0 // pred_check_branch
    %13 = sbr.rel (0) target = $region13
  $region12: #{audio_sed_forward.1} parent=0 // pred_region
    _
  $region13: #{audio_sed_forward.1} parent=0 // pred_fallthru
    _
  %v15 = vld [vmem:[%s1] sm:$0xf]
  %v16 = vld [vmem:[%s1 + $0x8] sm:$0xf]
  %v17 = vld [vmem:[%s1 + $0x10] sm:$0xf]
  %v18 = vld [vmem:[%s1 + $0x18] sm:$0xf]
  %v19 = vld [vmem:[%s1 + $0x20] sm:$0xf]
  %v20 = vld [vmem:[%s1 + $0x28] sm:$0xf]
  %v21 = vld [vmem:[%s1 + $0x30] sm:$0xf]
  %v22 = vld [vmem:[%s1 + $0x38] sm:$0xf]
  %v23 = vld [vmem:[%s1 + $0x40] sm:$0xf]
  %v24 = vld [vmem:[%s1 + $0x48] sm:$0xf]
  %v25 = vld [vmem:[%s1 + $0x50] sm:$0xf]
  %v26 = vld [vmem:[%s1 + $0x58] sm:$0xf]
  %v27 = vld [vmem:[%s1 + $0x60] sm:$0xf]
  %v28 = vld [vmem:[%s1 + $0x68] sm:$0xf]
  %v29 = vld [vmem:[%s1 + $0x70] sm:$0xf]
  %v30 = vld [vmem:[%s1 + $0x78] sm:$0xf]
  %v31 = vld [vmem:[%s1 + $0x80] sm:$0xf]
  %v32 = vld [vmem:[%s1 + $0x88] sm:$0xf]
  %v33 = vld [vmem:[%s0] sm:$0xf]
  %v34 = vld [vmem:[%s0 + $0x4] sm:$0xf]
  %v35 = vld [vmem:[%s0 + $0x8] sm:$0xf]
  %v36 = vld [vmem:[%s0 + $0xc] sm:$0xf]
  %v37 = vld [vmem:[%s0 + $0x10] sm:$0xf]
  %v38 = vld [vmem:[%s0 + $0x14] sm:$0xf]
  %v39 = vld [vmem:[%s0 + $0x18] sm:$0xf]
  %v40 = vld [vmem:[%s0 + $0x1c] sm:$0xf]
  %v41 = vld [vmem:[%s0 + $0x20] sm:$0xf]
  %v42 = vld [vmem:[%s0 + $0x24] sm:$0xf]
  %v43 = vld [vmem:[%s0 + $0x28] sm:$0xf]
  %v44 = vld [vmem:[%s0 + $0x2c] sm:$0xf]
  %v45 = vld [vmem:[%s0 + $0x30] sm:$0xf]
  %v46 = vld [vmem:[%s0 + $0x34] sm:$0xf]
  %v47 = vld [vmem:[%s0 + $0x38] sm:$0xf]
  %v48 = vld [vmem:[%s0 + $0x3c] sm:$0xf]
  %v67 = vunpack.c.l.b16 %v15
  %v68 = vunpack.c.l.b16 %v16
  %v69 = vunpack.c.l.b16 %v17
  %v70 = vunpack.c.l.b16 %v18
  %v71 = vunpack.c.l.b16 %v19
  %v72 = vunpack.c.l.b16 %v20
  %v73 = vunpack.c.l.b16 %v21
  %v74 = vunpack.c.l.b16 %v22
  %v75 = vunpack.c.l.b16 %v23
  %v76 = vunpack.c.l.b16 %v24
  %v77 = vunpack.c.l.b16 %v25
  %v78 = vunpack.c.l.b16 %v26
  %v79 = vunpack.c.l.b16 %v27
  %v80 = vunpack.c.l.b16 %v28
  %v81 = vunpack.c.l.b16 %v29
  %v82 = vunpack.c.l.b16 %v30
  %v83 = vunpack.c.l.b16 %v31
  %v84 = vunpack.c.l.b16 %v32
  %v85 = vpack.c.b16 %v68, %v67
  %v86 = vpack.c.b16 %v70, %v69
  %v87 = vpack.c.b16 %v72, %v71
  %v88 = vpack.c.b16 %v74, %v73
  %v89 = vpack.c.b16 %v76, %v75
  %v90 = vpack.c.b16 %v78, %v77
  %v91 = vpack.c.b16 %v80, %v79
  %v92 = vpack.c.b16 %v82, %v81
  %v93 = vpack.c.b16 %v84, %v83
  %v119 = vunpack.c.l.b16 %v33
  %v120 = vunpack.c.l.b16 %v34
  %v121 = vunpack.c.l.b16 %v35
  %v122 = vunpack.c.l.b16 %v36
  %v123 = vunpack.c.l.b16 %v37
  %v124 = vunpack.c.l.b16 %v38
  %v125 = vunpack.c.l.b16 %v39
  %v126 = vunpack.c.l.b16 %v40
  %v127 = vunpack.c.l.b16 %v41
  %v128 = vunpack.c.l.b16 %v42
  %v129 = vunpack.c.l.b16 %v43
  %v130 = vunpack.c.l.b16 %v44
  %v131 = vunpack.c.l.b16 %v45
  %v132 = vunpack.c.l.b16 %v46
  %v133 = vunpack.c.l.b16 %v47
  %v134 = vunpack.c.l.b16 %v48
  %v135 = vpack.c.b16 %v120, %v119
  %v136 = vpack.c.b16 %v122, %v121
  %v137 = vpack.c.b16 %v124, %v123
  %v138 = vpack.c.b16 %v126, %v125
  %v139 = vpack.c.b16 %v128, %v127
  %v140 = vpack.c.b16 %v130, %v129
  %v141 = vpack.c.b16 %v132, %v131
  %v142 = vpack.c.b16 %v134, %v133
  %151 = vmatprep.subr.bf16.mxu0 0
  %152 = vmatpush1.bf16.msra.mxu0 %v142
  %153 = vmatprep.subr.bf16.mxu0 0
  %154 = vmatpush1.bf16.msra.mxu0 %v141
  %155 = vmatprep.subr.bf16.mxu0 0
  %156 = vmatpush1.bf16.msra.mxu0 %v140
  %157 = vmatprep.subr.bf16.mxu0 0
  %158 = vmatpush1.bf16.msra.mxu0 %v139
  %159 = vmatprep.subr.bf16.mxu0 0
  %160 = vmatpush1.bf16.msra.mxu0 %v138
  %161 = vmatprep.subr.bf16.mxu0 0
  %162 = vmatpush1.bf16.msra.mxu0 %v137
  %163 = vmatprep.subr.bf16.mxu0 0
  %164 = vmatpush1.bf16.msra.mxu0 %v136
  %165 = vmatprep.subr.bf16.mxu0 0
  %166 = vmatpush1.bf16.msra.mxu0 %v135
  %167 = vmatprep.subr.bf16.mxu0 0
  %168 = vmatpush2.bf16.msra.mxu0 0
  %169 = vmatprep.subr.bf16.mxu0 0
  %170 = vmatpush2.bf16.msra.mxu0 0
  %171 = vmatprep.subr.bf16.mxu0 0
  %172 = vmatpush2.bf16.msra.mxu0 0
  %173 = vmatprep.subr.bf16.mxu0 0
  %174 = vmatpush2.bf16.msra.mxu0 0
  %175 = vmatprep.subr.bf16.mxu0 0
  %176 = vmatpush2.bf16.msra.mxu0 0
  %177 = vmatprep.subr.bf16.mxu0 0
  %178 = vmatpush2.bf16.msra.mxu0 0
  %179 = vmatprep.subr.bf16.mxu0 0
  %180 = vmatpush2.bf16.msra.mxu0 0
  %181 = vmatprep.subr.bf16.mxu0 0
  %182 = vmatpush2.bf16.msra.mxu0 0
  %183 = vmatprep.mubr.bf16.mxu0 0
  %184 = vmatmul.mubr.bf16.gmra.mxu0 %v85
  %v185 = vpop.f32.mrf.mxu0
  %v186 = vadd.f32 0.0, %v185
  %v187 = vpop.f32.mrf.mxu0
  %v188 = vpop.f32.mrf.mxu0
  %v189 = vadd.f32 0.0, %v188
  %v190 = vpop.f32.mrf.mxu0
  %191 = vmatprep.mubr.bf16.mxu0 0
  %192 = vmatmul.mubr.bf16.gmra.mxu0 %v86
  %v193 = vpop.f32.mrf.mxu0
  %v194 = vadd.f32 0.0, %v193
  %v195 = vpop.f32.mrf.mxu0
  %v196 = vpop.f32.mrf.mxu0
  %v197 = vadd.f32 0.0, %v196
  %v198 = vpop.f32.mrf.mxu0
  %199 = vmatprep.mubr.bf16.mxu0 0
  %200 = vmatmul.mubr.bf16.gmra.mxu0 %v87
  %v201 = vpop.f32.mrf.mxu0
  %v202 = vadd.f32 0.0, %v201
  %v203 = vpop.f32.mrf.mxu0
  %v204 = vpop.f32.mrf.mxu0
  %v205 = vadd.f32 0.0, %v204
  %v206 = vpop.f32.mrf.mxu0
  %207 = vmatprep.mubr.bf16.mxu0 0
  %208 = vmatmul.mubr.bf16.gmra.mxu0 %v88
  %v209 = vpop.f32.mrf.mxu0
  %v210 = vadd.f32 0.0, %v209
  %v211 = vpop.f32.mrf.mxu0
  %v212 = vpop.f32.mrf.mxu0
  %v213 = vadd.f32 0.0, %v212
  %v214 = vpop.f32.mrf.mxu0
  %215 = vmatprep.mubr.bf16.mxu0 0
  %216 = vmatmul.mubr.bf16.gmra.mxu0 %v89
  %v217 = vpop.f32.mrf.mxu0
  %v218 = vadd.f32 0.0, %v217
  %v219 = vpop.f32.mrf.mxu0
  %v220 = vpop.f32.mrf.mxu0
  %v221 = vadd.f32 0.0, %v220
  %v222 = vpop.f32.mrf.mxu0
  %223 = vmatprep.mubr.bf16.mxu0 0
  %224 = vmatmul.mubr.bf16.gmra.mxu0 %v90
  %v225 = vpop.f32.mrf.mxu0
  %v226 = vadd.f32 0.0, %v225
  %v227 = vpop.f32.mrf.mxu0
  %v228 = vpop.f32.mrf.mxu0
  %v229 = vadd.f32 0.0, %v228
  %v230 = vpop.f32.mrf.mxu0
  %231 = vmatprep.mubr.bf16.mxu0 0
  %232 = vmatmul.mubr.bf16.gmra.mxu0 %v91
  %v233 = vpop.f32.mrf.mxu0
  %v234 = vadd.f32 0.0, %v233
  %v235 = vpop.f32.mrf.mxu0
  %v236 = vpop.f32.mrf.mxu0
  %v237 = vadd.f32 0.0, %v236
  %v238 = vpop.f32.mrf.mxu0
  %239 = vmatprep.mubr.bf16.mxu0 0
  %240 = vmatmul.mubr.bf16.gmra.mxu0 %v92
  %v241 = vpop.f32.mrf.mxu0
  %v242 = vadd.f32 0.0, %v241
  %v243 = vpop.f32.mrf.mxu0
  %v244 = vpop.f32.mrf.mxu0
  %v245 = vadd.f32 0.0, %v244
  %v246 = vpop.f32.mrf.mxu0
  %247 = vmatprep.mubr.bf16.mxu0 0
  %248 = vmatmul.mubr.bf16.gmra.mxu0 %v93
  %v249 = vpop.f32.mrf.mxu0
  %v250 = vadd.f32 0.0, %v249
  %v251 = vpop.f32.mrf.mxu0
  %v252 = vpop.f32.mrf.mxu0
  %v253 = vadd.f32 0.0, %v252
  %v254 = vpop.f32.mrf.mxu0
  %255 = vdwg.mxu0
  %v256 = vmul.f32 %v186, %v186
  %v257 = vmul.f32 %v189, %v189
  %v258 = vmul.f32 %v194, %v194
  %v259 = vmul.f32 %v197, %v197
  %v260 = vmul.f32 %v202, %v202
  %v261 = vmul.f32 %v205, %v205
  %v262 = vmul.f32 %v210, %v210
  %v263 = vmul.f32 %v213, %v213
  %v264 = vmul.f32 %v218, %v218
  %v265 = vmul.f32 %v221, %v221
  %v266 = vmul.f32 %v226, %v226
  %v267 = vmul.f32 %v229, %v229
  %v268 = vmul.f32 %v234, %v234
  %v269 = vmul.f32 %v237, %v237
  %v270 = vmul.f32 %v242, %v242
  %v271 = vmul.f32 %v245, %v245
  %v272 = vmul.f32 %v250, %v250
  %v273 = vmul.f32 %v253, %v253
  %v274 = vadd.f32 %v256, %v265
  %v275 = vadd.f32 %v257, %v266
  %v276 = vadd.f32 %v258, %v267
  %v277 = vadd.f32 %v259, %v268
  %v278 = vadd.f32 %v260, %v269
  %v279 = vadd.f32 %v261, %v270
  %v280 = vadd.f32 %v262, %v271
  %v281 = vadd.f32 %v263, %v272
  %v282 = vadd.f32 %v264, %v273
  %v283 = vld [vmem:[%s2] sm:$0xff]
  %v284 = vld [vmem:[%s2 + $0x10] sm:$0xff]
  %v285 = vld [vmem:[%s2 + $0x20] sm:$0xff]
  %v286 = vld [vmem:[%s2 + $0x30] sm:$0xff]
  %vm287 = vcmask 588800
  %v289 = vsel %vm287, %v283, 0
  %v292 = vsel %vm287, %v284, 0
  %v295 = vsel %vm287, %v285, 0
  %v298 = vsel %vm287, %v286, 0
  %300 = vmatprep.subr.mxu0 0.0
  %301 = vmatpush1.msra.mxu0 0.0
  %302 = vmatprep.subr.mxu0 0.0
  %303 = vmatpush1.msra.mxu0 0.0
  %304 = vmatprep.subr.mxu0 0.0
  %305 = vmatpush1.msra.mxu0 0.0
  %306 = vmatprep.subr.mxu0 0.0
  %307 = vmatpush1.msra.mxu0 0.0
  %308 = vmatprep.subr.mxu0 0.0
  %309 = vmatpush1.msra.mxu0 0.0
  %310 = vmatprep.subr.mxu0 0.0
  %311 = vmatpush1.msra.mxu0 0.0
  %312 = vmatprep.subr.mxu0 0.0
  %313 = vmatpush1.msra.mxu0 0.0
  %314 = vmatprep.subr.mxu0 0.0
  %315 = vmatpush1.msra.mxu0 %v282
  %316 = vmatprep.subr.mxu0 0.0
  %317 = vmatpush1.msra.mxu0 %v281
  %318 = vmatprep.subr.mxu0 0.0
  %319 = vmatpush1.msra.mxu0 %v280
  %320 = vmatprep.subr.mxu0 0.0
  %321 = vmatpush1.msra.mxu0 %v279
  %322 = vmatprep.subr.mxu0 0.0
  %323 = vmatpush1.msra.mxu0 %v278
  %324 = vmatprep.subr.mxu0 0.0
  %325 = vmatpush1.msra.mxu0 %v277
  %326 = vmatprep.subr.mxu0 0.0
  %327 = vmatpush1.msra.mxu0 %v276
  %328 = vmatprep.subr.mxu0 0.0
  %329 = vmatpush1.msra.mxu0 %v275
  %330 = vmatprep.subr.mxu0 0.0
  %331 = vmatpush1.msra.mxu0 %v274
  %332 = vmatprep.subr.mxu0 0.0
  %333 = vmatpush2.msra.mxu0 0.0
  %334 = vmatprep.subr.mxu0 0.0
  %335 = vmatpush2.msra.mxu0 0.0
  %336 = vmatprep.subr.mxu0 0.0
  %337 = vmatpush2.msra.mxu0 0.0
  %338 = vmatprep.subr.mxu0 0.0
  %339 = vmatpush2.msra.mxu0 0.0
  %340 = vmatprep.subr.mxu0 0.0
  %341 = vmatpush2.msra.mxu0 0.0
  %342 = vmatprep.subr.mxu0 0.0
  %343 = vmatpush2.msra.mxu0 0.0
  %344 = vmatprep.subr.mxu0 0.0
  %345 = vmatpush2.msra.mxu0 0.0
  %346 = vmatprep.subr.mxu0 0.0
  %347 = vmatpush2.msra.mxu0 0.0
  %348 = vmatprep.subr.mxu0 0.0
  %349 = vmatpush2.msra.mxu0 0.0
  %350 = vmatprep.subr.mxu0 0.0
  %351 = vmatpush2.msra.mxu0 0.0
  %352 = vmatprep.subr.mxu0 0.0
  %353 = vmatpush2.msra.mxu0 0.0
  %354 = vmatprep.subr.mxu0 0.0
  %355 = vmatpush2.msra.mxu0 0.0
  %356 = vmatprep.subr.mxu0 0.0
  %357 = vmatpush2.msra.mxu0 0.0
  %358 = vmatprep.subr.mxu0 0.0
  %359 = vmatpush2.msra.mxu0 0.0
  %360 = vmatprep.subr.mxu0 0.0
  %361 = vmatpush2.msra.mxu0 0.0
  %362 = vmatprep.subr.mxu0 0.0
  %363 = vmatpush2.msra.mxu0 0.0
  %364 = vmatprep.mubr.f32.mxu0 0.0
  %365 = vmatmul.mubr.f32.gmra.mxu0 %v289
  %v366 = vpop.f32.mrf.mxu0
  %v367 = vadd.f32 0.0, %v366
  %v368 = vpop.f32.mrf.mxu0
  %369 = vmatprep.mubr.f32.mxu0 0.0
  %370 = vmatmul.mubr.f32.gmra.mxu0 %v292
  %v371 = vpop.f32.mrf.mxu0
  %v372 = vadd.f32 0.0, %v371
  %v373 = vpop.f32.mrf.mxu0
  %374 = vmatprep.mubr.f32.mxu0 0.0
  %375 = vmatmul.mubr.f32.gmra.mxu0 %v295
  %v376 = vpop.f32.mrf.mxu0
  %v377 = vadd.f32 0.0, %v376
  %v378 = vpop.f32.mrf.mxu0
  %379 = vmatprep.mubr.f32.mxu0 0.0
  %380 = vmatmul.mubr.f32.gmra.mxu0 %v298
  %v381 = vpop.f32.mrf.mxu0
  %v382 = vadd.f32 0.0, %v381
  %v383 = vpop.f32.mrf.mxu0
  %384 = vdwg.mxu0
  %v385 = vld [vmem:[%s2 + $0x8] sm:$0xff]
  %v386 = vld [vmem:[%s2 + $0x18] sm:$0xff]
  %v387 = vld [vmem:[%s2 + $0x28] sm:$0xff]
  %v388 = vld [vmem:[%s2 + $0x38] sm:$0xff]
  %v389 = vmax.f32 %v367, 1e-10
  %v390 = vmax.f32 %v372, 1e-10
  %v391 = vmax.f32 %v377, 1e-10
  %v392 = vmax.f32 %v382, 1e-10
  %v393 = vlog2.pop %v389
  %v394 = vmul.f32 %v393, 0.6931472
  %v395 = vlog2.pop %v390
  %v396 = vmul.f32 %v395, 0.6931472
  %v397 = vlog2.pop %v391
  %v398 = vmul.f32 %v397, 0.6931472
  %v399 = vlog2.pop %v392
  %v400 = vmul.f32 %v399, 0.6931472
  %402 = vset.pattern.permute.xlu0 0
  %403 = vperm.xlu0 %402, %v385
  %v404 = vpop.permute.xlu0 %403
  %407 = vset.pattern.permute.xlu0 0
  %408 = vperm.xlu0 %407, %v386
  %v409 = vpop.permute.xlu0 %408
  %412 = vset.pattern.permute.xlu0 0
  %413 = vperm.xlu0 %412, %v387
  %v414 = vpop.permute.xlu0 %413
  %417 = vset.pattern.permute.xlu0 0
  %418 = vperm.xlu0 %417, %v388
  %v419 = vpop.permute.xlu0 %418
  %v421 = vmul.f32 %v394, %v404
  %v422 = vmul.f32 %v396, %v409
  %v423 = vmul.f32 %v398, %v414
  %v424 = vmul.f32 %v400, %v419
  %425 = vset.pattern.permute.xlu0 1
  %426 = vperm.xlu0 %425, %v385
  %v427 = vpop.permute.xlu0 %426
  %429 = vset.pattern.permute.xlu0 1
  %430 = vperm.xlu0 %429, %v386
  %v431 = vpop.permute.xlu0 %430
  %433 = vset.pattern.permute.xlu0 1
  %434 = vperm.xlu0 %433, %v387
  %v435 = vpop.permute.xlu0 %434
  %437 = vset.pattern.permute.xlu0 1
  %438 = vperm.xlu0 %437, %v388
  %v439 = vpop.permute.xlu0 %438
  %v441 = vadd.f32 %v421, %v427
  %v442 = vadd.f32 %v422, %v431
  %v443 = vadd.f32 %v423, %v435
  %v444 = vadd.f32 %v424, %v439
  %v445 = vld [vmem:[%s1 + $0xb0] sm:$0x3]
  %v446 = vpack.c.bf16 %v442, %v441
  %v447 = vpack.c.bf16 %v444, %v443
  %vm448 = vcmask 261120
  %v450 = vsel %vm448, %v445, 0
  %452 = vmatprep.subr.bf16.mxu0 0
  %453 = vmatpush1.bf16.msra.mxu0 0
  %454 = vmatprep.subr.bf16.mxu0 0
  %455 = vmatpush1.bf16.msra.mxu0 0
  %456 = vmatprep.subr.bf16.mxu0 0
  %457 = vmatpush1.bf16.msra.mxu0 0
  %458 = vmatprep.subr.bf16.mxu0 0
  %459 = vmatpush1.bf16.msra.mxu0 0
  %460 = vmatprep.subr.bf16.mxu0 0
  %461 = vmatpush1.bf16.msra.mxu0 0
  %462 = vmatprep.subr.bf16.mxu0 0
  %463 = vmatpush1.bf16.msra.mxu0 0
  %464 = vmatprep.subr.bf16.mxu0 0
  %465 = vmatpush1.bf16.msra.mxu0 %v447
  %466 = vmatprep.subr.bf16.mxu0 0
  %467 = vmatpush1.bf16.msra.mxu0 %v446
  %468 = vmatprep.subr.bf16.mxu0 0
  %469 = vmatpush2.bf16.msra.mxu0 0
  %470 = vmatprep.subr.bf16.mxu0 0
  %471 = vmatpush2.bf16.msra.mxu0 0
  %472 = vmatprep.subr.bf16.mxu0 0
  %473 = vmatpush2.bf16.msra.mxu0 0
  %474 = vmatprep.subr.bf16.mxu0 0
  %475 = vmatpush2.bf16.msra.mxu0 0
  %476 = vmatprep.subr.bf16.mxu0 0
  %477 = vmatpush2.bf16.msra.mxu0 0
  %478 = vmatprep.subr.bf16.mxu0 0
  %479 = vmatpush2.bf16.msra.mxu0 0
  %480 = vmatprep.subr.bf16.mxu0 0
  %481 = vmatpush2.bf16.msra.mxu0 0
  %482 = vmatprep.subr.bf16.mxu0 0
  %483 = vmatpush2.bf16.msra.mxu0 0
  %484 = vmatprep.mubr.bf16.mxu0 0
  %485 = vmatmul.mubr.bf16.gmra.mxu0 %v450
  %v486 = vpop.f32.mrf.mxu0
  %v487 = vadd.f32 0.0, %v486
  %v488 = vpop.f32.mrf.mxu0
  %v489 = vpop.f32.mrf.mxu0
  %v490 = vpop.f32.mrf.mxu0
  %491 = vdwg.mxu0
  %v493 = vrot.slane %v487, 4
  %494 = vrot.lane.b32.xlu0 %v493, 96
  %v495 = vpop.permute.xlu0 %494
  %497 = vrot.lane.b32.xlu0 %v487, 64
  %v498 = vpop.permute.xlu0 %497
  %500 = vrot.lane.b32.xlu0 %v493, 32
  %v501 = vpop.permute.xlu0 %500
  %vm503 = vcmask 1043456
  %v504 = vsel %vm503, %v487, %v495
  %v505 = vsel %vm503, %v498, %v501
  %v506 = vld [vmem:[%s1 + $0x90] sm:$0xf]
  %v507 = vld [vmem:[%s1 + $0x98] sm:$0xf]
  %v508 = vld [vmem:[%s1 + $0xa0] sm:$0xf]
  %v509 = vld [vmem:[%s1 + $0xa8] sm:$0xf]
  %v510 = vpack.c.bf16 %v505, %v504
  %v515 = vunpack.c.l.b16 %v506
  %v516 = vunpack.c.l.b16 %v507
  %v517 = vunpack.c.l.b16 %v508
  %v518 = vunpack.c.l.b16 %v509
  %v519 = vpack.c.b16 %v516, %v515
  %v520 = vpack.c.b16 %v518, %v517
  %v524 = vsel %vm448, %v510, 0
  %526 = vmatprep.subr.bf16.mxu0 0
  %527 = vmatpush1.bf16.msra.mxu0 0
  %528 = vmatprep.subr.bf16.mxu0 0
  %529 = vmatpush1.bf16.msra.mxu0 0
  %530 = vmatprep.subr.bf16.mxu0 0
  %531 = vmatpush1.bf16.msra.mxu0 0
  %532 = vmatprep.subr.bf16.mxu0 0
  %533 = vmatpush1.bf16.msra.mxu0 0
  %534 = vmatprep.subr.bf16.mxu0 0
  %535 = vmatpush1.bf16.msra.mxu0 0
  %536 = vmatprep.subr.bf16.mxu0 0
  %537 = vmatpush1.bf16.msra.mxu0 0
  %538 = vmatprep.subr.bf16.mxu0 0
  %539 = vmatpush1.bf16.msra.mxu0 %v520
  %540 = vmatprep.subr.bf16.mxu0 0
  %541 = vmatpush1.bf16.msra.mxu0 %v519
  %542 = vmatprep.subr.bf16.mxu0 0
  %543 = vmatpush2.bf16.msra.mxu0 0
  %544 = vmatprep.subr.bf16.mxu0 0
  %545 = vmatpush2.bf16.msra.mxu0 0
  %546 = vmatprep.subr.bf16.mxu0 0
  %547 = vmatpush2.bf16.msra.mxu0 0
  %548 = vmatprep.subr.bf16.mxu0 0
  %549 = vmatpush2.bf16.msra.mxu0 0
  %550 = vmatprep.subr.bf16.mxu0 0
  %551 = vmatpush2.bf16.msra.mxu0 0
  %552 = vmatprep.subr.bf16.mxu0 0
  %553 = vmatpush2.bf16.msra.mxu0 0
  %554 = vmatprep.subr.bf16.mxu0 0
  %555 = vmatpush2.bf16.msra.mxu0 0
  %556 = vmatprep.subr.bf16.mxu0 0
  %557 = vmatpush2.bf16.msra.mxu0 0
  %558 = vmatprep.mubr.bf16.mxu0 0
  %559 = vmatmul.mubr.bf16.gmra.mxu0 %v524
  %v560 = vpop.f32.mrf.mxu0
  %v561 = vadd.f32 0.0, %v560
  %v562 = vpop.f32.mrf.mxu0
  %v563 = vpop.f32.mrf.mxu0
  %v564 = vadd.f32 0.0, %v563
  %v565 = vpop.f32.mrf.mxu0
  %566 = vdwg.mxu0
  %v567 = vld [vmem:[%s1 + $0xb8] sm:$0xff]
  %v568 = vld [vmem:[%s1 + $0xc0] sm:$0xff]
  %v569 = vld [vmem:[%s1 + $0xc8] sm:$0xff]
  %v570 = vld [vmem:[%s1 + $0xd0] sm:$0xff]
  %v571 = vld [vmem:[%s1 + $0xd8] sm:$0xff]
  %v572 = vld [vmem:[%s1 + $0xe0] sm:$0xff]
  %v573 = vld [vmem:[%s1 + $0xe8] sm:$0xff]
  %v574 = vld [vmem:[%s1 + $0xf0] sm:$0xff]
  %v575 = vld [vmem:[%s1 + $0xf8] sm:$0xff]
  %v576 = vld [vmem:[%s1 + $0x100] sm:$0xff]
  %v577 = vld [vmem:[%s1 + $0x108] sm:$0xff]
  %v578 = vld [vmem:[%s1 + $0x110] sm:$0xff]
  %v579 = vld [vmem:[%s1 + $0x118] sm:$0xff]
  %v580 = vld [vmem:[%s1 + $0x120] sm:$0xff]
  %v581 = vld [vmem:[%s1 + $0x128] sm:$0xff]
  %v582 = vld [vmem:[%s1 + $0x130] sm:$0xff]
  %s583 = scalar_lea.vmem %s2, 64
  %v584 = vld [vmem:[%s583] ss:$8 sm:$0x3]
  %v585 = vpack.c.bf16 %v564, %v561
  %v587 = vlaneseq
  %v588 = vshrl.u32 %v587, 7
  %v589 = vsub.s32 0, %v588
  %v590 = vrot.slane %v584, %v589
  %v591 = vlaneseq
  %v592 = vshrl.u32 %v591, 7
  %v593 = vsub.s32 1, %v592
  %v594 = vrot.slane %v584, %v593
  %v613 = vunpack.c.l.b16 %v567
  %v614 = vunpack.c.h.b16 %v567
  %v615 = vunpack.c.l.b16 %v568
  %v616 = vunpack.c.h.b16 %v568
  %v617 = vunpack.c.l.b16 %v569
  %v618 = vunpack.c.h.b16 %v569
  %v619 = vunpack.c.l.b16 %v570
  %v620 = vunpack.c.h.b16 %v570
  %v621 = vunpack.c.l.b16 %v571
  %v622 = vunpack.c.h.b16 %v571
  %v623 = vunpack.c.l.b16 %v572
  %v624 = vunpack.c.h.b16 %v572
  %v625 = vunpack.c.l.b16 %v573
  %v626 = vunpack.c.h.b16 %v573
  %v627 = vunpack.c.l.b16 %v574
  %v628 = vunpack.c.h.b16 %v574
  %v629 = vunpack.c.l.b16 %v575
  %v630 = vunpack.c.h.b16 %v575
  %v631 = vunpack.c.l.b16 %v576
  %v632 = vunpack.c.h.b16 %v576
  %v633 = vunpack.c.l.b16 %v577
  %v634 = vunpack.c.h.b16 %v577
  %v635 = vunpack.c.l.b16 %v578
  %v636 = vunpack.c.h.b16 %v578
  %v637 = vunpack.c.l.b16 %v579
  %v638 = vunpack.c.h.b16 %v579
  %v639 = vunpack.c.l.b16 %v580
  %v640 = vunpack.c.h.b16 %v580
  %v641 = vunpack.c.l.b16 %v581
  %v642 = vunpack.c.h.b16 %v581
  %v643 = vunpack.c.l.b16 %v582
  %v644 = vunpack.c.h.b16 %v582
  %v645 = vpack.c.b16 %v615, %v613
  %v646 = vpack.c.b16 %v616, %v614
  %v647 = vpack.c.b16 %v619, %v617
  %v648 = vpack.c.b16 %v620, %v618
  %v649 = vpack.c.b16 %v623, %v621
  %v650 = vpack.c.b16 %v624, %v622
  %v651 = vpack.c.b16 %v627, %v625
  %v652 = vpack.c.b16 %v628, %v626
  %v653 = vpack.c.b16 %v631, %v629
  %v654 = vpack.c.b16 %v632, %v630
  %v655 = vpack.c.b16 %v635, %v633
  %v656 = vpack.c.b16 %v636, %v634
  %v657 = vpack.c.b16 %v639, %v637
  %v658 = vpack.c.b16 %v640, %v638
  %v659 = vpack.c.b16 %v643, %v641
  %v660 = vpack.c.b16 %v644, %v642
  %677 = vmatprep.subr.bf16.mxu0 %v660
  %678 = vmatpush1.bf16.msra.mxu0 %v659
  %679 = vmatprep.subr.bf16.mxu0 %v658
  %680 = vmatpush1.bf16.msra.mxu0 %v657
  %681 = vmatprep.subr.bf16.mxu0 %v656
  %682 = vmatpush1.bf16.msra.mxu0 %v655
  %683 = vmatprep.subr.bf16.mxu0 %v654
  %684 = vmatpush1.bf16.msra.mxu0 %v653
  %685 = vmatprep.subr.bf16.mxu0 %v652
  %686 = vmatpush1.bf16.msra.mxu0 %v651
  %687 = vmatprep.subr.bf16.mxu0 %v650
  %688 = vmatpush1.bf16.msra.mxu0 %v649
  %689 = vmatprep.subr.bf16.mxu0 %v648
  %690 = vmatpush1.bf16.msra.mxu0 %v647
  %691 = vmatprep.subr.bf16.mxu0 %v646
  %692 = vmatpush1.bf16.msra.mxu0 %v645
  %693 = vmatprep.subr.bf16.mxu0 0
  %694 = vmatpush2.bf16.msra.mxu0 0
  %695 = vmatprep.subr.bf16.mxu0 0
  %696 = vmatpush2.bf16.msra.mxu0 0
  %697 = vmatprep.subr.bf16.mxu0 0
  %698 = vmatpush2.bf16.msra.mxu0 0
  %699 = vmatprep.subr.bf16.mxu0 0
  %700 = vmatpush2.bf16.msra.mxu0 0
  %701 = vmatprep.subr.bf16.mxu0 0
  %702 = vmatpush2.bf16.msra.mxu0 0
  %703 = vmatprep.subr.bf16.mxu0 0
  %704 = vmatpush2.bf16.msra.mxu0 0
  %705 = vmatprep.subr.bf16.mxu0 0
  %706 = vmatpush2.bf16.msra.mxu0 0
  %707 = vmatprep.subr.bf16.mxu0 0
  %708 = vmatpush2.bf16.msra.mxu0 0
  %709 = vmatprep.mubr.bf16.mxu0 0
  %710 = vmatmul.mubr.bf16.gmra.mxu0 %v585
  %v711 = vpop.f32.mrf.mxu0
  %v712 = vadd.f32 %v590, %v711
  %v713 = vpop.f32.mrf.mxu0
  %v714 = vadd.f32 %v594, %v713
  %v715 = vpop.f32.mrf.mxu0
  %v716 = vadd.f32 %v590, %v715
  %v717 = vpop.f32.mrf.mxu0
  %v718 = vadd.f32 %v594, %v717
  %719 = vdwg.mxu0
  %v720 = vmul.f32 %v712, %v712
  %v721 = vmul.f32 %v714, %v714
  %v722 = vmul.f32 %v716, %v716
  %v723 = vmul.f32 %v718, %v718
  %v724 = vmul.f32 %v712, %v720
  %v725 = vmul.f32 %v714, %v721
  %v726 = vmul.f32 %v716, %v722
  %v727 = vmul.f32 %v718, %v723
  %v728 = vmul.f32 %v724, 0.044715
  %v729 = vmul.f32 %v725, 0.044715
  %v730 = vmul.f32 %v726, 0.044715
  %v731 = vmul.f32 %v727, 0.044715
  %v732 = vadd.f32 %v712, %v728
  %v733 = vadd.f32 %v714, %v729
  %v734 = vadd.f32 %v716, %v730
  %v735 = vadd.f32 %v718, %v731
  %v736 = vmul.f32 %v732, 0.7978846
  %v737 = vmul.f32 %v733, 0.7978846
  %v738 = vmul.f32 %v734, 0.7978846
  %v739 = vmul.f32 %v735, 0.7978846
  %v740 = vtanh.pop %v736
  %v741 = vtanh.pop %v737
  %v742 = vtanh.pop %v738
  %v743 = vtanh.pop %v739
  %v744 = vadd.f32 %v740, 1.0
  %v745 = vadd.f32 %v741, 1.0
  %v746 = vadd.f32 %v742, 1.0
  %v747 = vadd.f32 %v743, 1.0
  %v748 = vmul.f32 %v744, 0.5
  %v749 = vmul.f32 %v745, 0.5
  %v750 = vmul.f32 %v746, 0.5
  %v751 = vmul.f32 %v747, 0.5
  %v752 = vmul.f32 %v712, %v748
  %v753 = vmul.f32 %v714, %v749
  %v754 = vmul.f32 %v716, %v750
  %v755 = vmul.f32 %v718, %v751
  %v756 = vsel %vm503, %v752, 0.0
  %v757 = vrot.slane %v756, 4
  %v758 = vadd.f32 %v756, %v757
  %v759 = vrot.slane %v758, 2
  %v760 = vadd.f32 %v758, %v759
  %v761 = vrot.slane %v760, 1
  %v762 = vadd.f32 %v760, %v761
  %v763 = vsel %vm503, %v753, 0.0
  %v764 = vrot.slane %v763, 4
  %v765 = vadd.f32 %v763, %v764
  %v766 = vrot.slane %v765, 2
  %v767 = vadd.f32 %v765, %v766
  %v768 = vrot.slane %v767, 1
  %v769 = vadd.f32 %v767, %v768
  %v772 = vrot.slane %v752, 4
  %v773 = vrot.slane %v753, 4
  %v776 = vsel %vm503, %v772, 0.0
  %v777 = vrot.slane %v776, 4
  %v778 = vadd.f32 %v776, %v777
  %v779 = vrot.slane %v778, 2
  %v780 = vadd.f32 %v778, %v779
  %v781 = vrot.slane %v780, 1
  %v782 = vadd.f32 %v780, %v781
  %v783 = vsel %vm503, %v773, 0.0
  %v784 = vrot.slane %v783, 4
  %v785 = vadd.f32 %v783, %v784
  %v786 = vrot.slane %v785, 2
  %v787 = vadd.f32 %v785, %v786
  %v788 = vrot.slane %v787, 1
  %v789 = vadd.f32 %v787, %v788
  %v790 = vsel %vm503, %v754, 0.0
  %v791 = vrot.slane %v790, 4
  %v792 = vadd.f32 %v790, %v791
  %v793 = vrot.slane %v792, 2
  %v794 = vadd.f32 %v792, %v793
  %v795 = vrot.slane %v794, 1
  %v796 = vadd.f32 %v794, %v795
  %v797 = vsel %vm503, %v755, 0.0
  %v798 = vrot.slane %v797, 4
  %v799 = vadd.f32 %v797, %v798
  %v800 = vrot.slane %v799, 2
  %v801 = vadd.f32 %v799, %v800
  %v802 = vrot.slane %v801, 1
  %v803 = vadd.f32 %v801, %v802
  %v806 = vrot.slane %v754, 4
  %v807 = vrot.slane %v755, 4
  %v810 = vsel %vm503, %v806, 0.0
  %v811 = vrot.slane %v810, 4
  %v812 = vadd.f32 %v810, %v811
  %v813 = vrot.slane %v812, 2
  %v814 = vadd.f32 %v812, %v813
  %v815 = vrot.slane %v814, 1
  %v816 = vadd.f32 %v814, %v815
  %v817 = vsel %vm503, %v807, 0.0
  %v818 = vrot.slane %v817, 4
  %v819 = vadd.f32 %v817, %v818
  %v820 = vrot.slane %v819, 2
  %v821 = vadd.f32 %v819, %v820
  %v822 = vrot.slane %v821, 1
  %v823 = vadd.f32 %v821, %v822
  %vm824 = vcmask 1040384
  %v825 = vsel %vm824, %v762, %v782
  %v826 = vsel %vm824, %v769, %v789
  %vm827 = vcmask 1041408
  %v828 = vsel %vm827, %v825, %v796
  %v829 = vsel %vm827, %v826, %v803
  %vm830 = vcmask 1042432
  %v831 = vsel %vm830, %v828, %v816
  %v832 = vsel %vm830, %v829, %v823
  %v833 = vmul.f32 %v831, 0.25
  %v834 = vmul.f32 %v832, 0.25
  %v837 = vrot.slane %v833, 7
  %v838 = vrot.slane %v834, 7
  %v841 = vsel %vm824, 0.0, %v837
  %v842 = vsel %vm824, 0.0, %v838
  %v843 = vrot.slane %v833, 1
  %v844 = vrot.slane %v834, 1
  %v847 = vsel %vm824, %v843, 0.0
  %v848 = vsel %vm824, %v844, 0.0
  %v849 = vsel %vm824, -1e+30, %v837
  %v850 = vsel %vm824, -1e+30, %v838
  %v851 = vsel %vm824, %v843, -1e+30
  %v852 = vsel %vm824, %v844, -1e+30
  %v853 = vmax.f32 %v849, %v833
  %v854 = vmax.f32 %v850, %v834
  %v855 = vmax.f32 %v853, %v851
  %v856 = vmax.f32 %v854, %v852
  %v857 = vadd.f32 %v841, %v833
  %v858 = vadd.f32 %v842, %v834
  %v859 = vadd.f32 %v857, %v847
  %v860 = vadd.f32 %v858, %v848
  %v861 = vmul.f32 %v859, 0.33333334
  %v862 = vmul.f32 %v860, 0.33333334
  %v863 = vadd.f32 %v855, %v861
  %v864 = vadd.f32 %v856, %v862
  %v865 = vsel %vm824, 0.0, %v843
  %v866 = vsel %vm824, 0.0, %v844
  %v867 = vrot.slane %v833, 3
  %v868 = vrot.slane %v834, 3
  %v871 = vsel %vm824, %v867, 0.0
  %v872 = vsel %vm824, %v868, 0.0
  %v873 = vsel %vm824, -1e+30, %v843
  %v874 = vsel %vm824, -1e+30, %v844
  %v875 = vsel %vm824, %v867, -1e+30
  %v876 = vsel %vm824, %v868, -1e+30
  %v877 = vrot.slane %v833, 2
  %v878 = vrot.slane %v834, 2
  %v881 = vmax.f32 %v873, %v877
  %v882 = vmax.f32 %v874, %v878
  %v883 = vmax.f32 %v881, %v875
  %v884 = vmax.f32 %v882, %v876
  %v885 = vadd.f32 %v865, %v877
  %v886 = vadd.f32 %v866, %v878
  %v887 = vadd.f32 %v885, %v871
  %v888 = vadd.f32 %v886, %v872
  %v889 = vmul.f32 %v887, 0.33333334
  %v890 = vmul.f32 %v888, 0.33333334
  %v891 = vadd.f32 %v883, %v889
  %v892 = vadd.f32 %v884, %v890
  %v895 = vrot.slane %v891, 6
  %v896 = vrot.slane %v892, 6
  %v899 = vsel %vm827, %v863, %v895
  %v900 = vsel %vm827, %v864, %v896
  %v901 = vld [vmem:[%s1 + $0x138] sm:$0xff]
  %v902 = vld [vmem:[%s1 + $0x140] sm:$0xff]
  %v903 = vld [vmem:[%s1 + $0x148] sm:$0xff]
  %v904 = vld [vmem:[%s1 + $0x150] sm:$0xff]
  %v905 = vld [vmem:[%s1 + $0x158] sm:$0xff]
  %v906 = vld [vmem:[%s1 + $0x160] sm:$0xff]
  %v907 = vld [vmem:[%s1 + $0x168] sm:$0xff]
  %v908 = vld [vmem:[%s1 + $0x170] sm:$0xff]
  %v909 = vld [vmem:[%s1 + $0x178] sm:$0xff]
  %v910 = vld [vmem:[%s1 + $0x180] sm:$0xff]
  %v911 = vld [vmem:[%s1 + $0x188] sm:$0xff]
  %v912 = vld [vmem:[%s1 + $0x190] sm:$0xff]
  %v913 = vld [vmem:[%s1 + $0x198] sm:$0xff]
  %v914 = vld [vmem:[%s1 + $0x1a0] sm:$0xff]
  %v915 = vld [vmem:[%s1 + $0x1a8] sm:$0xff]
  %v916 = vld [vmem:[%s1 + $0x1b0] sm:$0xff]
  %v917 = vld [vmem:[%s1 + $0x1b8] sm:$0xff]
  %v918 = vld [vmem:[%s1 + $0x1c0] sm:$0xff]
  %v919 = vld [vmem:[%s1 + $0x1c8] sm:$0xff]
  %v920 = vld [vmem:[%s1 + $0x1d0] sm:$0xff]
  %v921 = vld [vmem:[%s1 + $0x1d8] sm:$0xff]
  %v922 = vld [vmem:[%s1 + $0x1e0] sm:$0xff]
  %v923 = vld [vmem:[%s1 + $0x1e8] sm:$0xff]
  %v924 = vld [vmem:[%s1 + $0x1f0] sm:$0xff]
  %v925 = vld [vmem:[%s1 + $0x1f8] sm:$0xff]
  %v926 = vld [vmem:[%s1 + $0x200] sm:$0xff]
  %v927 = vld [vmem:[%s1 + $0x208] sm:$0xff]
  %v928 = vld [vmem:[%s1 + $0x210] sm:$0xff]
  %v929 = vld [vmem:[%s1 + $0x218] sm:$0xff]
  %v930 = vld [vmem:[%s1 + $0x220] sm:$0xff]
  %v931 = vld [vmem:[%s1 + $0x228] sm:$0xff]
  %v932 = vld [vmem:[%s1 + $0x230] sm:$0xff]
  %s933 = scalar_lea.vmem %s2, 65
  %v934 = vld [vmem:[%s933] ss:$8 sm:$0x3]
  %v935 = vpack.c.bf16 %v899, %v899
  %v936 = vpack.c.bf16 %v900, %v900
  %v938 = vlaneseq
  %v939 = vshrl.u32 %v938, 7
  %v940 = vsub.s32 0, %v939
  %v941 = vrot.slane %v934, %v940
  %v942 = vlaneseq
  %v943 = vshrl.u32 %v942, 7
  %v944 = vsub.s32 1, %v943
  %v945 = vrot.slane %v934, %v944
  %v980 = vunpack.c.l.b16 %v901
  %v981 = vunpack.c.h.b16 %v901
  %v982 = vunpack.c.l.b16 %v902
  %v983 = vunpack.c.h.b16 %v902
  %v984 = vunpack.c.l.b16 %v903
  %v985 = vunpack.c.h.b16 %v903
  %v986 = vunpack.c.l.b16 %v904
  %v987 = vunpack.c.h.b16 %v904
  %v988 = vunpack.c.l.b16 %v905
  %v989 = vunpack.c.h.b16 %v905
  %v990 = vunpack.c.l.b16 %v906
  %v991 = vunpack.c.h.b16 %v906
  %v992 = vunpack.c.l.b16 %v907
  %v993 = vunpack.c.h.b16 %v907
  %v994 = vunpack.c.l.b16 %v908
  %v995 = vunpack.c.h.b16 %v908
  %v996 = vunpack.c.l.b16 %v909
  %v997 = vunpack.c.h.b16 %v909
  %v998 = vunpack.c.l.b16 %v910
  %v999 = vunpack.c.h.b16 %v910
  %v1000 = vunpack.c.l.b16 %v911
  %v1001 = vunpack.c.h.b16 %v911
  %v1002 = vunpack.c.l.b16 %v912
  %v1003 = vunpack.c.h.b16 %v912
  %v1004 = vunpack.c.l.b16 %v913
  %v1005 = vunpack.c.h.b16 %v913
  %v1006 = vunpack.c.l.b16 %v914
  %v1007 = vunpack.c.h.b16 %v914
  %v1008 = vunpack.c.l.b16 %v915
  %v1009 = vunpack.c.h.b16 %v915
  %v1010 = vunpack.c.l.b16 %v916
  %v1011 = vunpack.c.h.b16 %v916
  %v1012 = vunpack.c.l.b16 %v917
  %v1013 = vunpack.c.h.b16 %v917
  %v1014 = vunpack.c.l.b16 %v918
  %v1015 = vunpack.c.h.b16 %v918
  %v1016 = vunpack.c.l.b16 %v919
  %v1017 = vunpack.c.h.b16 %v919
  %v1018 = vunpack.c.l.b16 %v920
  %v1019 = vunpack.c.h.b16 %v920
  %v1020 = vunpack.c.l.b16 %v921
  %v1021 = vunpack.c.h.b16 %v921
  %v1022 = vunpack.c.l.b16 %v922
  %v1023 = vunpack.c.h.b16 %v922
  %v1024 = vunpack.c.l.b16 %v923
  %v1025 = vunpack.c.h.b16 %v923
  %v1026 = vunpack.c.l.b16 %v924
  %v1027 = vunpack.c.h.b16 %v924
  %v1028 = vunpack.c.l.b16 %v925
  %v1029 = vunpack.c.h.b16 %v925
  %v1030 = vunpack.c.l.b16 %v926
  %v1031 = vunpack.c.h.b16 %v926
  %v1032 = vunpack.c.l.b16 %v927
  %v1033 = vunpack.c.h.b16 %v927
  %v1034 = vunpack.c.l.b16 %v928
  %v1035 = vunpack.c.h.b16 %v928
  %v1036 = vunpack.c.l.b16 %v929
  %v1037 = vunpack.c.h.b16 %v929
  %v1038 = vunpack.c.l.b16 %v930
  %v1039 = vunpack.c.h.b16 %v930
  %v1040 = vunpack.c.l.b16 %v931
  %v1041 = vunpack.c.h.b16 %v931
  %v1042 = vunpack.c.l.b16 %v932
  %v1043 = vunpack.c.h.b16 %v932
  %v1044 = vpack.c.b16 %v982, %v980
  %v1045 = vpack.c.b16 %v983, %v981
  %v1046 = vpack.c.b16 %v986, %v984
  %v1047 = vpack.c.b16 %v987, %v985
  %v1048 = vpack.c.b16 %v990, %v988
  %v1049 = vpack.c.b16 %v991, %v989
  %v1050 = vpack.c.b16 %v994, %v992
  %v1051 = vpack.c.b16 %v995, %v993
  %v1052 = vpack.c.b16 %v998, %v996
  %v1053 = vpack.c.b16 %v999, %v997
  %v1054 = vpack.c.b16 %v1002, %v1000
  %v1055 = vpack.c.b16 %v1003, %v1001
  %v1056 = vpack.c.b16 %v1006, %v1004
  %v1057 = vpack.c.b16 %v1007, %v1005
  %v1058 = vpack.c.b16 %v1010, %v1008
  %v1059 = vpack.c.b16 %v1011, %v1009
  %v1060 = vpack.c.b16 %v1014, %v1012
  %v1061 = vpack.c.b16 %v1015, %v1013
  %v1062 = vpack.c.b16 %v1018, %v1016
  %v1063 = vpack.c.b16 %v1019, %v1017
  %v1064 = vpack.c.b16 %v1022, %v1020
  %v1065 = vpack.c.b16 %v1023, %v1021
  %v1066 = vpack.c.b16 %v1026, %v1024
  %v1067 = vpack.c.b16 %v1027, %v1025
  %v1068 = vpack.c.b16 %v1030, %v1028
  %v1069 = vpack.c.b16 %v1031, %v1029
  %v1070 = vpack.c.b16 %v1034, %v1032
  %v1071 = vpack.c.b16 %v1035, %v1033
  %v1072 = vpack.c.b16 %v1038, %v1036
  %v1073 = vpack.c.b16 %v1039, %v1037
  %v1074 = vpack.c.b16 %v1042, %v1040
  %v1075 = vpack.c.b16 %v1043, %v1041
  %1108 = vmatprep.subr.bf16.mxu0 %v1059
  %1109 = vmatpush1.bf16.msra.mxu0 %v1058
  %1110 = vmatprep.subr.bf16.mxu0 %v1057
  %1111 = vmatpush1.bf16.msra.mxu0 %v1056
  %1112 = vmatprep.subr.bf16.mxu0 %v1055
  %1113 = vmatpush1.bf16.msra.mxu0 %v1054
  %1114 = vmatprep.subr.bf16.mxu0 %v1053
  %1115 = vmatpush1.bf16.msra.mxu0 %v1052
  %1116 = vmatprep.subr.bf16.mxu0 %v1051
  %1117 = vmatpush1.bf16.msra.mxu0 %v1050
  %1118 = vmatprep.subr.bf16.mxu0 %v1049
  %1119 = vmatpush1.bf16.msra.mxu0 %v1048
  %1120 = vmatprep.subr.bf16.mxu0 %v1047
  %1121 = vmatpush1.bf16.msra.mxu0 %v1046
  %1122 = vmatprep.subr.bf16.mxu0 %v1045
  %1123 = vmatpush1.bf16.msra.mxu0 %v1044
  %1124 = vmatprep.subr.bf16.mxu0 %v1075
  %1125 = vmatpush2.bf16.msra.mxu0 %v1074
  %1126 = vmatprep.subr.bf16.mxu0 %v1073
  %1127 = vmatpush2.bf16.msra.mxu0 %v1072
  %1128 = vmatprep.subr.bf16.mxu0 %v1071
  %1129 = vmatpush2.bf16.msra.mxu0 %v1070
  %1130 = vmatprep.subr.bf16.mxu0 %v1069
  %1131 = vmatpush2.bf16.msra.mxu0 %v1068
  %1132 = vmatprep.subr.bf16.mxu0 %v1067
  %1133 = vmatpush2.bf16.msra.mxu0 %v1066
  %1134 = vmatprep.subr.bf16.mxu0 %v1065
  %1135 = vmatpush2.bf16.msra.mxu0 %v1064
  %1136 = vmatprep.subr.bf16.mxu0 %v1063
  %1137 = vmatpush2.bf16.msra.mxu0 %v1062
  %1138 = vmatprep.subr.bf16.mxu0 %v1061
  %1139 = vmatpush2.bf16.msra.mxu0 %v1060
  %1140 = vmatprep.mubr.bf16.mxu0 %v936
  %1141 = vmatmul.mubr.bf16.gmra.mxu0 %v935
  %v1142 = vpop.f32.mrf.mxu0
  %v1143 = vadd.f32 %v941, %v1142
  %v1144 = vpop.f32.mrf.mxu0
  %v1145 = vadd.f32 %v945, %v1144
  %v1146 = vpop.f32.mrf.mxu0
  %v1147 = vpop.f32.mrf.mxu0
  %1148 = vdwg.mxu0
  %v1149 = vmax.f32 %v1143, 0.0
  %v1150 = vmax.f32 %v1145, 0.0
  %v1151 = vld [vmem:[%s1 + $0x238] sm:$0xf]
  %v1152 = vld [vmem:[%s1 + $0x240] sm:$0xf]
  %v1153 = vld [vmem:[%s1 + $0x248] sm:$0xf]
  %v1154 = vld [vmem:[%s1 + $0x250] sm:$0xf]
  %v1155 = vld [vmem:[%s1 + $0x258] sm:$0xf]
  %v1156 = vld [vmem:[%s1 + $0x260] sm:$0xf]
  %v1157 = vld [vmem:[%s1 + $0x268] sm:$0xf]
  %v1158 = vld [vmem:[%s1 + $0x270] sm:$0xf]
  %v1159 = vld [vmem:[%s1 + $0x278] sm:$0xf]
  %v1160 = vld [vmem:[%s1 + $0x280] sm:$0xf]
  %v1161 = vld [vmem:[%s1 + $0x288] sm:$0xf]
  %v1162 = vld [vmem:[%s1 + $0x290] sm:$0xf]
  %v1163 = vld [vmem:[%s1 + $0x298] sm:$0xf]
  %v1164 = vld [vmem:[%s1 + $0x2a0] sm:$0xf]
  %v1165 = vld [vmem:[%s1 + $0x2a8] sm:$0xf]
  %v1166 = vld [vmem:[%s1 + $0x2b0] sm:$0xf]
  %v1167 = vld [vmem:[%s1 + $0x2b8] sm:$0xf]
  %v1168 = vld [vmem:[%s1 + $0x2c0] sm:$0xf]
  %v1169 = vld [vmem:[%s1 + $0x2c8] sm:$0xf]
  %v1170 = vld [vmem:[%s1 + $0x2d0] sm:$0xf]
  %v1171 = vld [vmem:[%s1 + $0x2d8] sm:$0xf]
  %v1172 = vld [vmem:[%s1 + $0x2e0] sm:$0xf]
  %v1173 = vld [vmem:[%s1 + $0x2e8] sm:$0xf]
  %v1174 = vld [vmem:[%s1 + $0x2f0] sm:$0xf]
  %v1175 = vld [vmem:[%s1 + $0x2f8] sm:$0xf]
  %v1176 = vld [vmem:[%s1 + $0x300] sm:$0xf]
  %v1177 = vld [vmem:[%s1 + $0x308] sm:$0xf]
  %v1178 = vld [vmem:[%s1 + $0x310] sm:$0xf]
  %v1179 = vld [vmem:[%s1 + $0x318] sm:$0xf]
  %v1180 = vld [vmem:[%s1 + $0x320] sm:$0xf]
  %v1181 = vld [vmem:[%s1 + $0x328] sm:$0xf]
  %v1182 = vld [vmem:[%s1 + $0x330] sm:$0xf]
  %v1183 = vld [vmem:[%s2 + $0x42] ss:$0 sm:$0xff]
  %v1184 = vpack.c.bf16 %v1149, %v1149
  %v1185 = vpack.c.bf16 %v1150, %v1150
  %v1218 = vunpack.c.l.b16 %v1151
  %v1219 = vunpack.c.l.b16 %v1152
  %v1220 = vunpack.c.l.b16 %v1153
  %v1221 = vunpack.c.l.b16 %v1154
  %v1222 = vunpack.c.l.b16 %v1155
  %v1223 = vunpack.c.l.b16 %v1156
  %v1224 = vunpack.c.l.b16 %v1157
  %v1225 = vunpack.c.l.b16 %v1158
  %v1226 = vunpack.c.l.b16 %v1159
  %v1227 = vunpack.c.l.b16 %v1160
  %v1228 = vunpack.c.l.b16 %v1161
  %v1229 = vunpack.c.l.b16 %v1162
  %v1230 = vunpack.c.l.b16 %v1163
  %v1231 = vunpack.c.l.b16 %v1164
  %v1232 = vunpack.c.l.b16 %v1165
  %v1233 = vunpack.c.l.b16 %v1166
  %v1234 = vunpack.c.l.b16 %v1167
  %v1235 = vunpack.c.l.b16 %v1168
  %v1236 = vunpack.c.l.b16 %v1169
  %v1237 = vunpack.c.l.b16 %v1170
  %v1238 = vunpack.c.l.b16 %v1171
  %v1239 = vunpack.c.l.b16 %v1172
  %v1240 = vunpack.c.l.b16 %v1173
  %v1241 = vunpack.c.l.b16 %v1174
  %v1242 = vunpack.c.l.b16 %v1175
  %v1243 = vunpack.c.l.b16 %v1176
  %v1244 = vunpack.c.l.b16 %v1177
  %v1245 = vunpack.c.l.b16 %v1178
  %v1246 = vunpack.c.l.b16 %v1179
  %v1247 = vunpack.c.l.b16 %v1180
  %v1248 = vunpack.c.l.b16 %v1181
  %v1249 = vunpack.c.l.b16 %v1182
  %v1250 = vpack.c.b16 %v1219, %v1218
  %v1251 = vpack.c.b16 %v1221, %v1220
  %v1252 = vpack.c.b16 %v1223, %v1222
  %v1253 = vpack.c.b16 %v1225, %v1224
  %v1254 = vpack.c.b16 %v1227, %v1226
  %v1255 = vpack.c.b16 %v1229, %v1228
  %v1256 = vpack.c.b16 %v1231, %v1230
  %v1257 = vpack.c.b16 %v1233, %v1232
  %v1258 = vpack.c.b16 %v1235, %v1234
  %v1259 = vpack.c.b16 %v1237, %v1236
  %v1260 = vpack.c.b16 %v1239, %v1238
  %v1261 = vpack.c.b16 %v1241, %v1240
  %v1262 = vpack.c.b16 %v1243, %v1242
  %v1263 = vpack.c.b16 %v1245, %v1244
  %v1264 = vpack.c.b16 %v1247, %v1246
  %v1265 = vpack.c.b16 %v1249, %v1248
  %1282 = vmatprep.subr.bf16.mxu0 0
  %1283 = vmatpush1.bf16.msra.mxu0 %v1257
  %1284 = vmatprep.subr.bf16.mxu0 0
  %1285 = vmatpush1.bf16.msra.mxu0 %v1256
  %1286 = vmatprep.subr.bf16.mxu0 0
  %1287 = vmatpush1.bf16.msra.mxu0 %v1255
  %1288 = vmatprep.subr.bf16.mxu0 0
  %1289 = vmatpush1.bf16.msra.mxu0 %v1254
  %1290 = vmatprep.subr.bf16.mxu0 0
  %1291 = vmatpush1.bf16.msra.mxu0 %v1253
  %1292 = vmatprep.subr.bf16.mxu0 0
  %1293 = vmatpush1.bf16.msra.mxu0 %v1252
  %1294 = vmatprep.subr.bf16.mxu0 0
  %1295 = vmatpush1.bf16.msra.mxu0 %v1251
  %1296 = vmatprep.subr.bf16.mxu0 0
  %1297 = vmatpush1.bf16.msra.mxu0 %v1250
  %1298 = vmatprep.subr.bf16.mxu0 0
  %1299 = vmatpush2.bf16.msra.mxu0 %v1265
  %1300 = vmatprep.subr.bf16.mxu0 0
  %1301 = vmatpush2.bf16.msra.mxu0 %v1264
  %1302 = vmatprep.subr.bf16.mxu0 0
  %1303 = vmatpush2.bf16.msra.mxu0 %v1263
  %1304 = vmatprep.subr.bf16.mxu0 0
  %1305 = vmatpush2.bf16.msra.mxu0 %v1262
  %1306 = vmatprep.subr.bf16.mxu0 0
  %1307 = vmatpush2.bf16.msra.mxu0 %v1261
  %1308 = vmatprep.subr.bf16.mxu0 0
  %1309 = vmatpush2.bf16.msra.mxu0 %v1260
  %1310 = vmatprep.subr.bf16.mxu0 0
  %1311 = vmatpush2.bf16.msra.mxu0 %v1259
  %1312 = vmatprep.subr.bf16.mxu0 0
  %1313 = vmatpush2.bf16.msra.mxu0 %v1258
  %1314 = vmatprep.mubr.bf16.mxu0 %v1185
  %1315 = vmatmul.mubr.bf16.gmra.mxu0 %v1184
  %v1316 = vpop.f32.mrf.mxu0
  %v1317 = vadd.f32 %v1183, %v1316
  %v1318 = vpop.f32.mrf.mxu0
  %v1319 = vpop.f32.mrf.mxu0
  %v1320 = vpop.f32.mrf.mxu0
  %1321 = vdwg.mxu0
  %v1322 = vmax.f32 %v1317, -10.0
  %v1323 = vmin.f32 %v1322, 10.0
  %vm1324 = vcmask 58368
  %v1325 = vsel %vm1324, %v1323, -inf
  %v1326 = vrot.slane %v1325, 4
  %v1327 = vmax.f32 %v1325, %v1326
  %v1328 = vrot.slane %v1327, 2
  %v1329 = vmax.f32 %v1327, %v1328
  %v1330 = vrot.slane %v1329, 1
  %v1331 = vmax.f32 %v1329, %v1330
  %v1332 = vsub.f32 %v1323, %v1331
  %v1333 = vmul.f32 %v1332, 1.442695
  %v1334 = vpow.pop %v1333
  %v1335 = vsel %vm1324, %v1334, 0.0
  %v1336 = vrot.slane %v1335, 4
  %v1337 = vadd.f32 %v1335, %v1336
  %v1338 = vrot.slane %v1337, 2
  %v1339 = vadd.f32 %v1337, %v1338
  %v1340 = vrot.slane %v1339, 1
  %v1341 = vadd.f32 %v1339, %v1340
  %v1342 = vrcp.pop %v1341
  %v1343 = vmul.f32 %v1334, %v1342
  %v1344 = vxor.u32 %v1317, 2147483648
  %v1345 = vmul.f32 %v1344, 1.442695
  %v1346 = vpow.pop %v1345
  %v1347 = vadd.f32 %v1346, 1.0
  %v1348 = vrcp.pop %v1347
  %v1349 = vmul.f32 1.0, %v1348
  %1351 = vrot.lane.b32.xlu0 %v1349, 120
  %v1352 = vpop.permute.xlu0 %1351
  %v1354 = vmul.f32 %v1343, %v1352
  %v1355 = vsel %vm1324, %v1354, 0.0
  %v1356 = vrot.slane %v1355, 4
  %v1357 = vadd.f32 %v1355, %v1356
  %v1358 = vrot.slane %v1357, 2
  %v1359 = vadd.f32 %v1357, %v1358
  %v1360 = vrot.slane %v1359, 1
  %v1361 = vadd.f32 %v1359, %v1360
  %1363 = vrot.lane.b32.xlu0 %v1317, 120
  %v1364 = vpop.permute.xlu0 %1363
  %v1366 = vmul.f32 %v1343, %v1364
  %v1367 = vsel %vm1324, %v1366, 0.0
  %v1368 = vrot.slane %v1367, 4
  %v1369 = vadd.f32 %v1367, %v1368
  %v1370 = vrot.slane %v1369, 2
  %v1371 = vadd.f32 %v1369, %v1370
  %v1372 = vrot.slane %v1371, 1
  %v1373 = vadd.f32 %v1371, %v1372
  %v1374 = vrot.slane %v1349, 6
  %1375 = vrot.lane.b32.xlu0 %v1374, 120
  %v1376 = vpop.permute.xlu0 %1375
  %v1378 = vsel %vm824, %v1361, %v1373
  %v1379 = vsel %vm827, %v1378, %v1376
  %vm1380 = vcmask 60418
  %v1381 = vsel %vm1380, %v1323, -inf
  %v1382 = vrot.slane %v1381, 4
  %v1383 = vmax.f32 %v1381, %v1382
  %v1384 = vrot.slane %v1383, 2
  %v1385 = vmax.f32 %v1383, %v1384
  %v1386 = vrot.slane %v1385, 1
  %v1387 = vmax.f32 %v1385, %v1386
  %v1388 = vsub.f32 %v1323, %v1387
  %v1389 = vmul.f32 %v1388, 1.442695
  %v1390 = vpow.pop %v1389
  %v1392 = vrot.slane %v1390, 2
  %v1394 = vsel %vm1324, %v1392, 0.0
  %v1395 = vrot.slane %v1394, 4
  %v1396 = vadd.f32 %v1394, %v1395
  %v1397 = vrot.slane %v1396, 2
  %v1398 = vadd.f32 %v1396, %v1397
  %v1399 = vrot.slane %v1398, 1
  %v1400 = vadd.f32 %v1398, %v1399
  %v1401 = vrcp.pop %v1400
  %v1402 = vmul.f32 %v1390, %v1401
  %v1403 = vmul.f32 %v1402, %v1352
  %v1405 = vrot.slane %v1403, 2
  %v1407 = vsel %vm1324, %v1405, 0.0
  %v1408 = vrot.slane %v1407, 4
  %v1409 = vadd.f32 %v1407, %v1408
  %v1410 = vrot.slane %v1409, 2
  %v1411 = vadd.f32 %v1409, %v1410
  %v1412 = vrot.slane %v1411, 1
  %v1413 = vadd.f32 %v1411, %v1412
  %v1414 = vmul.f32 %v1402, %v1364
  %v1416 = vrot.slane %v1414, 2
  %v1418 = vsel %vm1324, %v1416, 0.0
  %v1419 = vrot.slane %v1418, 4
  %v1420 = vadd.f32 %v1418, %v1419
  %v1421 = vrot.slane %v1420, 2
  %v1422 = vadd.f32 %v1420, %v1421
  %v1423 = vrot.slane %v1422, 1
  %v1424 = vadd.f32 %v1422, %v1423
  %v1425 = vsel %vm824, %v1413, %v1424
  %v1426 = vsel %vm827, %v1425, %v1352
  %v1428 = vrot.slane %v1426, 4
  %v1430 = vsel %vm503, %v1379, %v1428
  %vm1431 = vcmask 64512
  %v1432 = vsel %vm1431, %v1430, 0.0
  %1433 = vst [vmem:[%s3] sm:$0xff] %v1432
  // Predicated region
  $region14: #{audio_sed_forward.1} parent=0 // pred_check
    _
  $region15: #{audio_sed_forward.1} parent=0 // pred_check_branch
    %1435 = sbr.rel (0) target = $region17
  $region16: #{audio_sed_forward.1} parent=0 // pred_region
    _
  $region17: #{audio_sed_forward.1} parent=0 // pred_fallthru
    _
  // Predicated region
  $region18: #{audio_sed_forward.1} parent=0 // pred_check
    _
  $region19: #{audio_sed_forward.1} parent=0 // pred_check_branch
    %1437 = sbr.rel (0) target = $region21
  $region20: #{audio_sed_forward.1} parent=0 // pred_region
    _
  $region21: #{audio_sed_forward.1} parent=0 // pred_fallthru
    _

</llo_original>
